<compile_context>
chip_gen: v6e
topology: v6e:2x2x1
jax: 0.10.0
libtpu: 0.0.40
codegen_flags: <defaults>
</compile_context>

<pallas_src>
import functools

import jax
import jax.numpy as jnp
from jax.experimental import pallas as pl
from jax.experimental.pallas import tpu as pltpu


def _round_up(x: int, m: int) -> int:
    return (x + m - 1) // m * m


def _ffn_kernel(x_ref, w1_ref, b1_ref, w2_ref, b2_ref, o_ref):
    # fc1: (tb, in) @ (in, hid) + (1, hid)  -- MXU, f32 accumulation.
    h = jnp.dot(x_ref[...], w1_ref[...], preferred_element_type=jnp.float32)
    h = jnp.maximum(h + b1_ref[...].astype(jnp.float32), 0.0)  # ReLU
    # fc2: (tb, hid) @ (hid, out) + (1, out); cast h to the weight dtype so a
    # bf16 weight path runs at the full bf16 MXU rate, still accumulate in f32.
    y = jnp.dot(h.astype(w2_ref.dtype), w2_ref[...],
                preferred_element_type=jnp.float32)
    y = y + b2_ref[...].astype(jnp.float32)
    o_ref[...] = jax.nn.sigmoid(y).astype(o_ref.dtype)  # Sigmoid


@functools.lru_cache(maxsize=None)
def _build_ffn_call(batch_p, in_p, hid_p, out_p, out_dtype, block_b,
                    vmem_limit_bytes, single_buffer_params):
    """Builds the pallas_call for padded shapes (all ints, cached)."""
    if single_buffer_params:
        param_kw = dict(pipeline_mode=pl.Buffered(1))
    else:
        param_kw = {}

    in_specs = [
        # x: one batch tile per grid step (default double-buffered pipeline).
        pl.BlockSpec((block_b, in_p), lambda i: (i, 0)),
        # Grid-invariant params: same block every step -> stay resident; single
        # buffering avoids wasting 2x their VMEM footprint.
        pl.BlockSpec((in_p, hid_p), lambda i: (0, 0), **param_kw),
        pl.BlockSpec((1, hid_p), lambda i: (0, 0), **param_kw),
        pl.BlockSpec((hid_p, out_p), lambda i: (0, 0), **param_kw),
        pl.BlockSpec((1, out_p), lambda i: (0, 0), **param_kw),
    ]
    out_specs = pl.BlockSpec((block_b, out_p), lambda i: (i, 0))

    return pl.pallas_call(
        _ffn_kernel,
        out_shape=jax.ShapeDtypeStruct((batch_p, out_p), out_dtype),
        grid=(batch_p // block_b,),
        in_specs=in_specs,
        out_specs=out_specs,
        compiler_params=pltpu.CompilerParams(
            dimension_semantics=("parallel",),
            vmem_limit_bytes=int(vmem_limit_bytes),
        ),
    )


def ffn_forward(x, w1, b1, w2, b2, *, block_b=256):
    """sigmoid(relu(x @ w1 + b1) @ w2 + b2) as one fused Pallas TPU kernel."""
    batch, input_size = x.shape
    hidden_size = w1.shape[1]
    output_size = w2.shape[1]
    b1 = b1.reshape(1, hidden_size)
    b2 = b2.reshape(1, output_size)

    # Lane-dense / MXU-aligned padding: feature dims -> multiples of 128,
    # batch tile -> multiple of 128 (use 256 when the batch allows it).
    in_p = _round_up(input_size, 128)
    hid_p = _round_up(hidden_size, 128)
    out_p = _round_up(output_size, 128)
    block_b_eff = _round_up(min(block_b, _round_up(batch, 128)), 128)
    batch_p = _round_up(batch, block_b_eff)

    x_p = jnp.pad(x, ((0, batch_p - batch), (0, in_p - input_size)))
    w1_p = jnp.pad(w1, ((0, in_p - input_size), (0, hid_p - hidden_size)))
    b1_p = jnp.pad(b1, ((0, 0), (0, hid_p - hidden_size)))
    w2_p = jnp.pad(w2, ((0, hid_p - hidden_size), (0, out_p - output_size)))
    b2_p = jnp.pad(b2, ((0, 0), (0, out_p - output_size)))

    # Explicit scoped-VMEM budget: double-buffered x/out tiles, resident
    # (single-buffered) params, f32 intermediates, plus slack.
    isz = lambda a: jnp.dtype(a.dtype).itemsize
    needed = (
        2 * block_b_eff * in_p * isz(x_p)            # x tiles (2 buffers)
        + 2 * block_b_eff * out_p * isz(x_p)         # out tiles (2 buffers)
        + in_p * hid_p * isz(w1_p) + hid_p * isz(b1_p)
        + hid_p * out_p * isz(w2_p) + out_p * isz(b2_p)
        + block_b_eff * hid_p * 4                    # f32 hidden intermediate
        + block_b_eff * out_p * 4                    # f32 pre-sigmoid
    )
    vmem_limit = max(16 << 20, min(int(needed * 1.5) + (2 << 20), 64 << 20))

    def run(single_buffer_params):
        call = _build_ffn_call(batch_p, in_p, hid_p, out_p, x.dtype,
                               block_b_eff, vmem_limit, single_buffer_params)
        return jax.block_until_ready(call(x_p, w1_p, b1_p, w2_p, b2_p))

    try:
        out_full = run(True)
    except Exception:
        # Fallback if this JAX build rejects Buffered(1) for pallas_call specs.
        out_full = run(False)

    return out_full[:batch, :output_size]


def init_params(key, input_size, hidden_size, output_size, dtype=jnp.float32):
    """Param init mirroring nn.Linear (weights stored transposed)."""
    k1, k2, k3, k4 = jax.random.split(key, 4)
    lim1 = 1.0 / (input_size ** 0.5)
    lim2 = 1.0 / (hidden_size ** 0.5)
    w1 = jax.random.uniform(k1, (input_size, hidden_size), dtype, -lim1, lim1)
    b1 = jax.random.uniform(k2, (1, hidden_size), dtype, -lim1, lim1)
    w2 = jax.random.uniform(k3, (hidden_size, output_size), dtype, -lim2, lim2)
    b2 = jax.random.uniform(k4, (1, output_size), dtype, -lim2, lim2)
    return w1, b1, w2, b2


if __name__ == "__main__":
    input_size, hidden_size, output_size = 64, 128, 8
    batch = 512  # 2 batch tiles of 256 -> multi-step "parallel" grid

    key = jax.random.PRNGKey(0)
    kx, kp = jax.random.split(key)
    x = jax.random.normal(kx, (batch, input_size), jnp.float32)
    w1, b1, w2, b2 = init_params(kp, input_size, hidden_size, output_size)

    out = ffn_forward(x, w1, b1, w2, b2, block_b=256)
    out = jax.block_until_ready(out)

    # Reference check in plain JAX (accurate f32 matmuls).
    hi = jax.lax.Precision.HIGHEST
    ref_h = jnp.maximum(jnp.dot(x, w1, precision=hi) + b1, 0.0)
    ref = jax.nn.sigmoid(jnp.dot(ref_h, w2, precision=hi) + b2)

    assert out.shape == (batch, output_size)
    assert jnp.allclose(out, ref, atol=1e-4, rtol=1e-4), float(
        jnp.max(jnp.abs(out - ref)))

    print("KERNEL_OK")
</pallas_src>

<mosaic_0001>
module attributes {stable_mosaic.version = 11 : i64} {
  func.func @_ffn_kernel(%arg0: i32, %arg1: memref<256x128xf32, #tpu.memory_space<vmem>>, %arg2: memref<128x128xf32, #tpu.memory_space<vmem>>, %arg3: memref<1x128xf32, #tpu.memory_space<vmem>>, %arg4: memref<128x128xf32, #tpu.memory_space<vmem>>, %arg5: memref<1x128xf32, #tpu.memory_space<vmem>>, %arg6: memref<256x128xf32, #tpu.memory_space<vmem>>) attributes {dimension_semantics = [#tpu.dimension_semantics<parallel>], iteration_bounds = array<i64: 2>, scalar_prefetch = 0 : i64, scratch_operands = 0 : i64, tpu.core_type = #tpu.core_type<tc>, window_params = [{transform_indices = @transform_0, window_bounds = array<i64: 256, 128>}, {pipeline_mode = #tpu.pipeline_mode<synchronous>, transform_indices = @transform_1, window_bounds = array<i64: 128, 128>}, {pipeline_mode = #tpu.pipeline_mode<synchronous>, transform_indices = @transform_2, window_bounds = array<i64: 1, 128>}, {pipeline_mode = #tpu.pipeline_mode<synchronous>, transform_indices = @transform_3, window_bounds = array<i64: 128, 128>}, {pipeline_mode = #tpu.pipeline_mode<synchronous>, transform_indices = @transform_4, window_bounds = array<i64: 1, 128>}, {transform_indices = @transform_5, window_bounds = array<i64: 256, 128>}]} {
    %c0 = arith.constant 0 : index
    %c0_0 = arith.constant 0 : index
    %0 = vector.load %arg1[%c0, %c0_0] : memref<256x128xf32, #tpu.memory_space<vmem>>, vector<256x128xf32>
    %c0_1 = arith.constant 0 : index
    %c0_2 = arith.constant 0 : index
    %1 = vector.load %arg2[%c0_1, %c0_2] : memref<128x128xf32, #tpu.memory_space<vmem>>, vector<128x128xf32>
    %cst = arith.constant dense<0.000000e+00> : vector<256x128xf32>
    %2 = tpu.matmul %0, %1, %cst {dimension_numbers = #tpu.dot_dimension_numbers<[1], [0], [0], [1], [0, 0, 1, 1], [], []>} : vector<256x128xf32>, vector<128x128xf32>, vector<256x128xf32> -> vector<256x128xf32>
    %c0_3 = arith.constant 0 : index
    %c0_4 = arith.constant 0 : index
    %3 = vector.load %arg3[%c0_3, %c0_4] : memref<1x128xf32, #tpu.memory_space<vmem>>, vector<1x128xf32>
    %4 = vector.broadcast %3 : vector<1x128xf32> to vector<256x128xf32>
    %5 = arith.addf %2, %4 : vector<256x128xf32>
    %cst_5 = arith.constant 0.000000e+00 : f32
    %6 = vector.broadcast %cst_5 : f32 to vector<256x128xf32>
    %7 = arith.maximumf %5, %6 : vector<256x128xf32>
    %c0_6 = arith.constant 0 : index
    %c0_7 = arith.constant 0 : index
    %8 = vector.load %arg4[%c0_6, %c0_7] : memref<128x128xf32, #tpu.memory_space<vmem>>, vector<128x128xf32>
    %cst_8 = arith.constant dense<0.000000e+00> : vector<256x128xf32>
    %9 = tpu.matmul %7, %8, %cst_8 {dimension_numbers = #tpu.dot_dimension_numbers<[1], [0], [0], [1], [0, 0, 1, 1], [], []>} : vector<256x128xf32>, vector<128x128xf32>, vector<256x128xf32> -> vector<256x128xf32>
    %c0_9 = arith.constant 0 : index
    %c0_10 = arith.constant 0 : index
    %10 = vector.load %arg5[%c0_9, %c0_10] : memref<1x128xf32, #tpu.memory_space<vmem>>, vector<1x128xf32>
    %11 = vector.broadcast %10 : vector<1x128xf32> to vector<256x128xf32>
    %12 = arith.addf %9, %11 : vector<256x128xf32>
    %13 = arith.negf %12 : vector<256x128xf32>
    %14 = math.exp %13 : vector<256x128xf32>
    %cst_11 = arith.constant 1.000000e+00 : f32
    %15 = vector.broadcast %cst_11 : f32 to vector<256x128xf32>
    %16 = arith.addf %15, %14 : vector<256x128xf32>
    %17 = arith.divf %15, %16 : vector<256x128xf32>
    %c0_12 = arith.constant 0 : index
    %c0_13 = arith.constant 0 : index
    %18 = vector.load %arg6[%c0_12, %c0_13] : memref<256x128xf32, #tpu.memory_space<vmem>>, vector<256x128xf32>
    tpu.vector_store %arg6[%c0_12, %c0_13], %17 {strides = array<i32>} : memref<256x128xf32, #tpu.memory_space<vmem>>, vector<256x128xf32>,
    return
  }
  func.func @transform_0(%arg0: i32) -> (i32, i32) {
    %c0_i32 = arith.constant 0 : i32
    %c0_i32_0 = arith.constant 0 : i32
    return %arg0, %c0_i32 : i32, i32
  }
  func.func @transform_1(%arg0: i32) -> (i32, i32) {
    %c0_i32 = arith.constant 0 : i32
    %c0_i32_0 = arith.constant 0 : i32
    %c0_i32_1 = arith.constant 0 : i32
    return %c0_i32, %c0_i32_0 : i32, i32
  }
  func.func @transform_2(%arg0: i32) -> (i32, i32) {
    %c0_i32 = arith.constant 0 : i32
    %c0_i32_0 = arith.constant 0 : i32
    %c0_i32_1 = arith.constant 0 : i32
    return %c0_i32, %c0_i32_0 : i32, i32
  }
  func.func @transform_3(%arg0: i32) -> (i32, i32) {
    %c0_i32 = arith.constant 0 : i32
    %c0_i32_0 = arith.constant 0 : i32
    %c0_i32_1 = arith.constant 0 : i32
    return %c0_i32, %c0_i32_0 : i32, i32
  }
  func.func @transform_4(%arg0: i32) -> (i32, i32) {
    %c0_i32 = arith.constant 0 : i32
    %c0_i32_0 = arith.constant 0 : i32
    %c0_i32_1 = arith.constant 0 : i32
    return %c0_i32, %c0_i32_0 : i32, i32
  }
  func.func @transform_5(%arg0: i32) -> (i32, i32) {
    %c0_i32 = arith.constant 0 : i32
    %c0_i32_0 = arith.constant 0 : i32
    return %arg0, %c0_i32 : i32, i32
  }
}

module attributes {stable_mosaic.version = 11 : i64} {
  func.func @_ffn_kernel(%arg0: i32, %arg1: memref<256x128xf32, #tpu.memory_space<vmem>>, %arg2: memref<128x128xf32, #tpu.memory_space<vmem>>, %arg3: memref<1x128xf32, #tpu.memory_space<vmem>>, %arg4: memref<128x128xf32, #tpu.memory_space<vmem>>, %arg5: memref<1x128xf32, #tpu.memory_space<vmem>>, %arg6: memref<256x128xf32, #tpu.memory_space<vmem>>) attributes {dimension_semantics = [#tpu.dimension_semantics<parallel>], iteration_bounds = array<i64: 2>, scalar_prefetch = 0 : i64, scratch_operands = 0 : i64, tpu.core_type = #tpu.core_type<tc>, window_params = [{transform_indices = @transform_0, window_bounds = array<i64: 256, 128>}, {pipeline_mode = #tpu.pipeline_mode<synchronous>, transform_indices = @transform_1, window_bounds = array<i64: 128, 128>}, {pipeline_mode = #tpu.pipeline_mode<synchronous>, transform_indices = @transform_2, window_bounds = array<i64: 1, 128>}, {pipeline_mode = #tpu.pipeline_mode<synchronous>, transform_indices = @transform_3, window_bounds = array<i64: 128, 128>}, {pipeline_mode = #tpu.pipeline_mode<synchronous>, transform_indices = @transform_4, window_bounds = array<i64: 1, 128>}, {transform_indices = @transform_5, window_bounds = array<i64: 256, 128>}]} {
    %c0 = arith.constant 0 : index
    %c0_0 = arith.constant 0 : index
    %0 = vector.load %arg1[%c0, %c0_0] : memref<256x128xf32, #tpu.memory_space<vmem>>, vector<256x128xf32>
    %c0_1 = arith.constant 0 : index
    %c0_2 = arith.constant 0 : index
    %1 = vector.load %arg2[%c0_1, %c0_2] : memref<128x128xf32, #tpu.memory_space<vmem>>, vector<128x128xf32>
    %cst = arith.constant dense<0.000000e+00> : vector<256x128xf32>
    %2 = tpu.matmul %0, %1, %cst {dimension_numbers = #tpu.dot_dimension_numbers<[1], [0], [0], [1], [0, 0, 1, 1], [], []>} : vector<256x128xf32>, vector<128x128xf32>, vector<256x128xf32> -> vector<256x128xf32>
    %c0_3 = arith.constant 0 : index
    %c0_4 = arith.constant 0 : index
    %3 = vector.load %arg3[%c0_3, %c0_4] : memref<1x128xf32, #tpu.memory_space<vmem>>, vector<1x128xf32>
    %4 = vector.broadcast %3 : vector<1x128xf32> to vector<256x128xf32>
    %5 = arith.addf %2, %4 : vector<256x128xf32>
    %cst_5 = arith.constant 0.000000e+00 : f32
    %6 = vector.broadcast %cst_5 : f32 to vector<256x128xf32>
    %7 = arith.maximumf %5, %6 : vector<256x128xf32>
    %c0_6 = arith.constant 0 : index
    %c0_7 = arith.constant 0 : index
    %8 = vector.load %arg4[%c0_6, %c0_7] : memref<128x128xf32, #tpu.memory_space<vmem>>, vector<128x128xf32>
    %cst_8 = arith.constant dense<0.000000e+00> : vector<256x128xf32>
    %9 = tpu.matmul %7, %8, %cst_8 {dimension_numbers = #tpu.dot_dimension_numbers<[1], [0], [0], [1], [0, 0, 1, 1], [], []>} : vector<256x128xf32>, vector<128x128xf32>, vector<256x128xf32> -> vector<256x128xf32>
    %c0_9 = arith.constant 0 : index
    %c0_10 = arith.constant 0 : index
    %10 = vector.load %arg5[%c0_9, %c0_10] : memref<1x128xf32, #tpu.memory_space<vmem>>, vector<1x128xf32>
    %11 = vector.broadcast %10 : vector<1x128xf32> to vector<256x128xf32>
    %12 = arith.addf %9, %11 : vector<256x128xf32>
    %13 = arith.negf %12 : vector<256x128xf32>
    %14 = math.exp %13 : vector<256x128xf32>
    %cst_11 = arith.constant 1.000000e+00 : f32
    %15 = vector.broadcast %cst_11 : f32 to vector<256x128xf32>
    %16 = arith.addf %15, %14 : vector<256x128xf32>
    %17 = arith.divf %15, %16 : vector<256x128xf32>
    %c0_12 = arith.constant 0 : index
    %c0_13 = arith.constant 0 : index
    %18 = vector.load %arg6[%c0_12, %c0_13] : memref<256x128xf32, #tpu.memory_space<vmem>>, vector<256x128xf32>
    tpu.vector_store %arg6[%c0_12, %c0_13], %17 {strides = array<i32>} : memref<256x128xf32, #tpu.memory_space<vmem>>, vector<256x128xf32>,
    return
  }
  func.func @transform_0(%arg0: i32) -> (i32, i32) {
    %c0_i32 = arith.constant 0 : i32
    %c0_i32_0 = arith.constant 0 : i32
    return %arg0, %c0_i32 : i32, i32
  }
  func.func @transform_1(%arg0: i32) -> (i32, i32) {
    %c0_i32 = arith.constant 0 : i32
    %c0_i32_0 = arith.constant 0 : i32
    %c0_i32_1 = arith.constant 0 : i32
    return %c0_i32, %c0_i32_0 : i32, i32
  }
  func.func @transform_2(%arg0: i32) -> (i32, i32) {
    %c0_i32 = arith.constant 0 : i32
    %c0_i32_0 = arith.constant 0 : i32
    %c0_i32_1 = arith.constant 0 : i32
    return %c0_i32, %c0_i32_0 : i32, i32
  }
  func.func @transform_3(%arg0: i32) -> (i32, i32) {
    %c0_i32 = arith.constant 0 : i32
    %c0_i32_0 = arith.constant 0 : i32
    %c0_i32_1 = arith.constant 0 : i32
    return %c0_i32, %c0_i32_0 : i32, i32
  }
  func.func @transform_4(%arg0: i32) -> (i32, i32) {
    %c0_i32 = arith.constant 0 : i32
    %c0_i32_0 = arith.constant 0 : i32
    %c0_i32_1 = arith.constant 0 : i32
    return %c0_i32, %c0_i32_0 : i32, i32
  }
  func.func @transform_5(%arg0: i32) -> (i32, i32) {
    %c0_i32 = arith.constant 0 : i32
    %c0_i32_0 = arith.constant 0 : i32
    return %arg0, %c0_i32 : i32, i32
  }
}

</mosaic_0001>

<llo_original>
// kernel: tpu_custom_call.1
$region0: #{tpu_custom_call.1}
  #allocation0 [shape = 'u32[]', space=smem, size = 0x4, offset = 0x4, fixed_abs, tag = 'smem constant byte address 0x4 - core index']
  #allocation1 [shape = 'u32[144,128]{1,0:T(1,128)}', space=vmem, size = 0x12000, scoped, tag = 'internal scratch']
  %s0 = inlined_call_operand.hbm [shape: f32[512,128], index: 0, kind: input, shape index: {}]
  %s1 = inlined_call_operand.hbm [shape: f32[128,128], index: 1, kind: input, shape index: {}]
  %s2 = inlined_call_operand.vmem [shape: f32[1,128], index: 2, kind: input, shape index: {}]
  %s3 = inlined_call_operand.hbm [shape: f32[128,128], index: 3, kind: input, shape index: {}]
  %s4 = inlined_call_operand.vmem [shape: f32[1,128], index: 4, kind: input, shape index: {}]
  %s5 = inlined_call_operand.hbm [shape: f32[512,128], index: 5, kind: output, shape index: {}]
  %s6 = sld [smem:[#allocation0]]
  $region65: #{tpu_custom_call.1} parent=0
    _
  %s8 = ssub.s32 1, %s6
  %s9 = scalar_select 0, %s8, %s6
  $region1: #{tpu_custom_call.1} parent=0
    #allocation2 [shape = 'u8[262144]{0}', space=vmem, size = 0x40000, scoped, tag = 'input window, operand 0']
    #allocation3 [shape = 's32[2]{0}', space=sflag, size = 0x8, scoped, tag = 'scoped memory for tpu_custom_call.1']
    #allocation4 [shape = 's32[2]{0}', space=sflag, size = 0x8, scoped, tag = 'scoped memory for tpu_custom_call.1']
    #allocation5 [shape = 'u8[65536]{0}', space=vmem, size = 0x10000, scoped, tag = 'input window, operand 1, single buffered']
    #allocation6 [shape = 's32[1]{0}', space=sflag, size = 0x4, scoped, tag = 'scoped memory for tpu_custom_call.1']
    #allocation7 [shape = 'u8[65536]{0}', space=vmem, size = 0x10000, scoped, tag = 'input window, operand 3, single buffered']
    #allocation8 [shape = 'u8[262144]{0}', space=vmem, size = 0x40000, scoped, tag = 'output window, operand 0']
    %10 = vsyncpa [#allocation3], 0
    %s11 = scalar_lea.sflag [#allocation3], 1
    %12 = vsyncpa %s11, 0
    %13 = vsyncpa [#allocation6], 0
    %14 = vsyncpa [#allocation4], 0
    %s15 = scalar_lea.sflag [#allocation4], 1
    %16 = vsyncpa %s15, 0
    loop: start=0, step=1, limit=4
    $region2: #{tpu_custom_call.1} parent=1 // loop_pre_header
      _
    $region3: #{tpu_custom_call.1} parent=1 // loop_header
      %s18 = sphi 0, %s22
      %p19 = scmp.ge.s32.totalorder %s18, 4
      %s28 = sphi 0, %s30
      %s31 = sphi 0, %s28
      %s32 = sphi 0, %s31
      %s48 = sphi 0, %s32
      %s52 = sphi 0, %s52
      %s54 = sphi 0, %s52
      %s55 = sphi 0, %s54
      %s69 = sphi 0, %s55
      %s73 = sphi 0, %s73
      %s75 = sphi 0, %s73
      %s76 = sphi 0, %s75
      %s90 = sphi 0, %s76
      %s94 = sphi 0, %s94
      %s96 = sphi 0, %s94
      %s97 = sphi 0, %s96
      %s111 = sphi 0, %s97
      %s115 = sphi 0, %s115
      %s117 = sphi 0, %s115
      %s118 = sphi 0, %s117
      %s132 = sphi 0, %s118
      %s138 = sphi 0, %s140
      %s141 = sphi 0, %s138
      %s142 = sphi 0, %s141
      %s158 = sphi 0, %s142
    $region4: #{tpu_custom_call.1} parent=1 // loop_header_branch
      %21 = sbr.rel (%p19) target = $region8
    $region5: #{tpu_custom_call.1} parent=1 // loop_body
      %s23 = ssub.s32 %s18, 1
      %s24 = ssub.s32 %s18, 2
      %s25 = sadd.s32 %s18, 1
      %s26 = ssub.s32 %s18, %s25
      %p27 = scmp.eq.s32.totalorder %s26, 0
      %s29 = sadd.s32 %s28, 1
      %s30 = scalar_select %p27, %s28, %s29
      %p33 = pneg %p27
      %p34 = scmp.eq.s32.totalorder %s18, 1
      %p35 = por %p33, %p34
      %p36 = scmp.ne.s32.totalorder %s28, %s31
      %p37 = scmp.eq.s32.totalorder %s18, 0
      %p38 = por %p36, %p37
      %p39 = scmp.ne.s32.totalorder %s28, %s31
      %p40 = scmp.eq.s32.totalorder %s23, 1
      %p41 = por %p39, %p40
      %p42 = scmp.ne.s32.totalorder %s31, %s32
      %p43 = scmp.eq.s32.totalorder %s23, 0
      %p44 = por %p42, %p43
      %p45 = scmp.ne.s32.totalorder %s31, %s32
      %p46 = scmp.eq.s32.totalorder %s24, 1
      %p47 = por %p45, %p46
      %p49 = scmp.ne.s32.totalorder %s32, %s48
      %p50 = scmp.eq.s32.totalorder %s24, 0
      %p51 = por %p49, %p50
      %s53 = sadd.s32 %s52, 1
      %p56 = scmp.eq.s32.totalorder %s18, 1
      %p57 = scmp.ne.s32.totalorder %s52, %s54
      %p58 = scmp.eq.s32.totalorder %s18, 0
      %p59 = por %p57, %p58
      %p60 = scmp.ne.s32.totalorder %s52, %s54
      %p61 = scmp.eq.s32.totalorder %s23, 1
      %p62 = por %p60, %p61
      %p63 = scmp.ne.s32.totalorder %s54, %s55
      %p64 = scmp.eq.s32.totalorder %s23, 0
      %p65 = por %p63, %p64
      %p66 = scmp.ne.s32.totalorder %s54, %s55
      %p67 = scmp.eq.s32.totalorder %s24, 1
      %p68 = por %p66, %p67
      %p70 = scmp.ne.s32.totalorder %s55, %s69
      %p71 = scmp.eq.s32.totalorder %s24, 0
      %p72 = por %p70, %p71
      %s74 = sadd.s32 %s73, 1
      %p77 = scmp.eq.s32.totalorder %s18, 1
      %p78 = scmp.ne.s32.totalorder %s73, %s75
      %p79 = scmp.eq.s32.totalorder %s18, 0
      %p80 = por %p78, %p79
      %p81 = scmp.ne.s32.totalorder %s73, %s75
      %p82 = scmp.eq.s32.totalorder %s23, 1
      %p83 = por %p81, %p82
      %p84 = scmp.ne.s32.totalorder %s75, %s76
      %p85 = scmp.eq.s32.totalorder %s23, 0
      %p86 = por %p84, %p85
      %p87 = scmp.ne.s32.totalorder %s75, %s76
      %p88 = scmp.eq.s32.totalorder %s24, 1
      %p89 = por %p87, %p88
      %p91 = scmp.ne.s32.totalorder %s76, %s90
      %p92 = scmp.eq.s32.totalorder %s24, 0
      %p93 = por %p91, %p92
      %s95 = sadd.s32 %s94, 1
      %p98 = scmp.eq.s32.totalorder %s18, 1
      %p99 = scmp.ne.s32.totalorder %s94, %s96
      %p100 = scmp.eq.s32.totalorder %s18, 0
      %p101 = por %p99, %p100
      %p102 = scmp.ne.s32.totalorder %s94, %s96
      %p103 = scmp.eq.s32.totalorder %s23, 1
      %p104 = por %p102, %p103
      %p105 = scmp.ne.s32.totalorder %s96, %s97
      %p106 = scmp.eq.s32.totalorder %s23, 0
      %p107 = por %p105, %p106
      %p108 = scmp.ne.s32.totalorder %s96, %s97
      %p109 = scmp.eq.s32.totalorder %s24, 1
      %p110 = por %p108, %p109
      %p112 = scmp.ne.s32.totalorder %s97, %s111
      %p113 = scmp.eq.s32.totalorder %s24, 0
      %p114 = por %p112, %p113
      %s116 = sadd.s32 %s115, 1
      %p119 = scmp.eq.s32.totalorder %s18, 1
      %p120 = scmp.ne.s32.totalorder %s115, %s117
      %p121 = scmp.eq.s32.totalorder %s18, 0
      %p122 = por %p120, %p121
      %p123 = scmp.ne.s32.totalorder %s115, %s117
      %p124 = scmp.eq.s32.totalorder %s23, 1
      %p125 = por %p123, %p124
      %p126 = scmp.ne.s32.totalorder %s117, %s118
      %p127 = scmp.eq.s32.totalorder %s23, 0
      %p128 = por %p126, %p127
      %p129 = scmp.ne.s32.totalorder %s117, %s118
      %p130 = scmp.eq.s32.totalorder %s24, 1
      %p131 = por %p129, %p130
      %p133 = scmp.ne.s32.totalorder %s118, %s132
      %p134 = scmp.eq.s32.totalorder %s24, 0
      %p135 = por %p133, %p134
      %s136 = ssub.s32 %s18, %s25
      %p137 = scmp.eq.s32.totalorder %s136, 0
      %s139 = sadd.s32 %s138, 1
      %s140 = scalar_select %p137, %s138, %s139
      %p143 = pneg %p137
      %p144 = scmp.eq.s32.totalorder %s18, 1
      %p145 = por %p143, %p144
      %p146 = scmp.ne.s32.totalorder %s138, %s141
      %p147 = scmp.eq.s32.totalorder %s18, 0
      %p148 = por %p146, %p147
      %p149 = scmp.ne.s32.totalorder %s138, %s141
      %p150 = scmp.eq.s32.totalorder %s23, 1
      %p151 = por %p149, %p150
      %p152 = scmp.ne.s32.totalorder %s141, %s142
      %p153 = scmp.eq.s32.totalorder %s23, 0
      %p154 = por %p152, %p153
      %p155 = scmp.ne.s32.totalorder %s141, %s142
      %p156 = scmp.eq.s32.totalorder %s24, 1
      %p157 = por %p155, %p156
      %p159 = scmp.ne.s32.totalorder %s142, %s158
      %p160 = scmp.eq.s32.totalorder %s24, 0
      %p161 = por %p159, %p160
      %p162 = scmp.le.s32.totalorder 1, %s18
      %p163 = scmp.lt.s32.totalorder %s18, 3
      %p164 = pnand %p162, %p163
      %p165 = pneg %p164
      // Predicated region
      $region9: #{tpu_custom_call.1} parent=5 // pred_check
        _
      $region10: #{tpu_custom_call.1} parent=5 // pred_check_branch
        %167 = sbr.rel (%p164) target = $region12
      $region11: #{tpu_custom_call.1} parent=5 // pred_region
        %s168 = ssub.s32 %s18, 1
        // Predicated region
        $region13: #{tpu_custom_call.1} parent=11 // pred_check
          %p169 = pneg %p65
        $region14: #{tpu_custom_call.1} parent=11 // pred_check_branch
          %171 = sbr.rel (%p169) target = $region16
        $region15: #{tpu_custom_call.1} parent=11 // pred_region
          %s173 = ssub.s32 2048, 2048
          %174 = vsyncadd [#allocation6], %s173
          %s175 = sshll.u32 [#allocation5], 4
          %s176 = int_to_ptr.vmem [resolvable:$true] %s175
          %181 = dma.hbm_to_vmem [thread:$0]  %s1, 2048, %s176, [#allocation6], 128, 128, 8
        $region16: #{tpu_custom_call.1} parent=11 // pred_fallthru
          _
        // Predicated region
        $region17: #{tpu_custom_call.1} parent=11 // pred_check
          %p182 = pneg %p86
        $region18: #{tpu_custom_call.1} parent=11 // pred_check_branch
          %184 = sbr.rel (%p182) target = $region20
        $region19: #{tpu_custom_call.1} parent=11 // pred_region
          _
        $region20: #{tpu_custom_call.1} parent=11 // pred_fallthru
          _
        // Predicated region
        $region21: #{tpu_custom_call.1} parent=11 // pred_check
          %p185 = pneg %p107
        $region22: #{tpu_custom_call.1} parent=11 // pred_check_branch
          %187 = sbr.rel (%p185) target = $region24
        $region23: #{tpu_custom_call.1} parent=11 // pred_region
          %s189 = ssub.s32 2048, 2048
          %190 = vsyncadd [#allocation6], %s189
          %s191 = sshll.u32 [#allocation7], 4
          %s192 = int_to_ptr.vmem [resolvable:$true] %s191
          %197 = dma.hbm_to_vmem [thread:$0]  %s3, 2048, %s192, [#allocation6], 128, 128, 8
        $region24: #{tpu_custom_call.1} parent=11 // pred_fallthru
          _
        // Predicated region
        $region25: #{tpu_custom_call.1} parent=11 // pred_check
          %p198 = pneg %p128
        $region26: #{tpu_custom_call.1} parent=11 // pred_check_branch
          %200 = sbr.rel (%p198) target = $region28
        $region27: #{tpu_custom_call.1} parent=11 // pred_region
          _
        $region28: #{tpu_custom_call.1} parent=11 // pred_fallthru
          _
      $region12: #{tpu_custom_call.1} parent=5 // pred_fallthru
        _
      %p201 = scmp.lt.s32.totalorder %s18, 2
      // Predicated region
      $region29: #{tpu_custom_call.1} parent=5 // pred_check
        %p202 = pneg %p201
      $region30: #{tpu_custom_call.1} parent=5 // pred_check_branch
        %204 = sbr.rel (%p202) target = $region32
      $region31: #{tpu_custom_call.1} parent=5 // pred_region
        // Predicated region
        $region33: #{tpu_custom_call.1} parent=31 // pred_check
          %p205 = pneg %p38
        $region34: #{tpu_custom_call.1} parent=31 // pred_check_branch
          %207 = sbr.rel (%p205) target = $region36
        $region35: #{tpu_custom_call.1} parent=31 // pred_region
          %s208 = sand.u32 %s28, 1
          %s209 = scalar_lea.sflag [#allocation3], %s208
          %s210 = sand.u32 %s28, 1
          %s211 = smul.addr %s210, 256
          %s212 = scalar_lea.vmem [#allocation2], %s211
          %s213 = smul.u32 32, %s18
          %s215 = ssub.s32 4096, 4096
          %216 = vsyncadd %s209, %s215
          %s217 = smul.addr %s213, 128
          %s218 = scalar_lea.hbm %s0, %s217
          %s219 = sshll.u32 %s212, 4
          %s220 = int_to_ptr.vmem [resolvable:$true] %s219
          %225 = dma.hbm_to_vmem [thread:$0]  %s218, 4096, %s220, %s209, 128, 128, 8
        $region36: #{tpu_custom_call.1} parent=31 // pred_fallthru
          _
      $region32: #{tpu_custom_call.1} parent=5 // pred_fallthru
        _
      %p226 = scmp.le.s32.totalorder 1, %s18
      %p227 = scmp.lt.s32.totalorder %s18, 3
      %p228 = pnand %p226, %p227
      %p229 = pneg %p228
      // Predicated region
      $region37: #{tpu_custom_call.1} parent=5 // pred_check
        _
      $region38: #{tpu_custom_call.1} parent=5 // pred_check_branch
        %231 = sbr.rel (%p228) target = $region40
      $region39: #{tpu_custom_call.1} parent=5 // pred_region
        %s232 = ssub.s32 %s18, 1
        %s233 = sand.u32 %s31, 1
        %s234 = scalar_lea.sflag [#allocation3], %s233
        %s235 = sand.u32 %s31, 1
        %s236 = smul.addr %s235, 256
        %s237 = scalar_lea.vmem [#allocation2], %s236
        // Predicated region
        $region41: #{tpu_custom_call.1} parent=39 // pred_check
          %p238 = pneg %p44
        $region42: #{tpu_custom_call.1} parent=39 // pred_check_branch
          %240 = sbr.rel (%p238) target = $region44
        $region43: #{tpu_custom_call.1} parent=39 // pred_region
          %241 = dma.done %s234, 4096
        $region44: #{tpu_custom_call.1} parent=39 // pred_fallthru
          _
        // Predicated region
        $region45: #{tpu_custom_call.1} parent=39 // pred_check
          %p242 = pneg %p65
        $region46: #{tpu_custom_call.1} parent=39 // pred_check_branch
          %244 = sbr.rel (%p242) target = $region48
        $region47: #{tpu_custom_call.1} parent=39 // pred_region
          %245 = dma.done [#allocation6], 2048
        $region48: #{tpu_custom_call.1} parent=39 // pred_fallthru
          _
        // Predicated region
        $region49: #{tpu_custom_call.1} parent=39 // pred_check
          %p246 = pneg %p107
        $region50: #{tpu_custom_call.1} parent=39 // pred_check_branch
          %248 = sbr.rel (%p246) target = $region52
        $region51: #{tpu_custom_call.1} parent=39 // pred_region
          %249 = dma.done [#allocation6], 2048
        $region52: #{tpu_custom_call.1} parent=39 // pred_fallthru
          _
        %s250 = sand.u32 %s31, 1
        %s251 = scalar_lea.sflag [#allocation3], %s250
        %s252 = sand.u32 %s31, 1
        %s253 = smul.addr %s252, 256
        %s254 = scalar_lea.vmem [#allocation2], %s253
        %p255 = pneg %p44
        %p256 = pneg %p41
        %p257 = pneg %p65
        %p258 = pneg %p62
        %p259 = pneg %p86
        %p260 = pneg %p83
        %p261 = pneg %p107
        %p262 = pneg %p104
        %p263 = pneg %p128
        %p264 = pneg %p125
        %p265 = pneg %p154
        %p266 = pneg %p151
        %s267 = sand.u32 %s141, 1
        %s268 = scalar_lea.sflag [#allocation4], %s267
        %s269 = sand.u32 %s141, 1
        %s270 = smul.addr %s269, 256
        %s271 = scalar_lea.vmem [#allocation8], %s270
        %s272 = smul.u32 32, %s23
        %s273 = smul.u32 32, %s23
        %v274 = vld [vmem:[%s237] sm:$0xff]
        %v275 = vld [vmem:[%s237 + $0x8] sm:$0xff]
        %v276 = vld [vmem:[%s237 + $0x10] sm:$0xff]
        %v277 = vld [vmem:[%s237 + $0x18] sm:$0xff]
        %v278 = vld [vmem:[%s237 + $0x20] sm:$0xff]
        %v279 = vld [vmem:[%s237 + $0x28] sm:$0xff]
        %v280 = vld [vmem:[%s237 + $0x30] sm:$0xff]
        %v281 = vld [vmem:[%s237 + $0x38] sm:$0xff]
        %v282 = vld [vmem:[%s237 + $0x40] sm:$0xff]
        %v283 = vld [vmem:[%s237 + $0x48] sm:$0xff]
        %v284 = vld [vmem:[%s237 + $0x50] sm:$0xff]
        %v285 = vld [vmem:[%s237 + $0x58] sm:$0xff]
        %v286 = vld [vmem:[%s237 + $0x60] sm:$0xff]
        %v287 = vld [vmem:[%s237 + $0x68] sm:$0xff]
        %v288 = vld [vmem:[%s237 + $0x70] sm:$0xff]
        %v289 = vld [vmem:[%s237 + $0x78] sm:$0xff]
        %v290 = vld [vmem:[%s237 + $0x80] sm:$0xff]
        %v291 = vld [vmem:[%s237 + $0x88] sm:$0xff]
        %v292 = vld [vmem:[%s237 + $0x90] sm:$0xff]
        %v293 = vld [vmem:[%s237 + $0x98] sm:$0xff]
        %v294 = vld [vmem:[%s237 + $0xa0] sm:$0xff]
        %v295 = vld [vmem:[%s237 + $0xa8] sm:$0xff]
        %v296 = vld [vmem:[%s237 + $0xb0] sm:$0xff]
        %v297 = vld [vmem:[%s237 + $0xb8] sm:$0xff]
        %v298 = vld [vmem:[%s237 + $0xc0] sm:$0xff]
        %v299 = vld [vmem:[%s237 + $0xc8] sm:$0xff]
        %v300 = vld [vmem:[%s237 + $0xd0] sm:$0xff]
        %v301 = vld [vmem:[%s237 + $0xd8] sm:$0xff]
        %v302 = vld [vmem:[%s237 + $0xe0] sm:$0xff]
        %v303 = vld [vmem:[%s237 + $0xe8] sm:$0xff]
        %v304 = vld [vmem:[%s237 + $0xf0] sm:$0xff]
        %v305 = vld [vmem:[%s237 + $0xf8] sm:$0xff]
        %v306 = vld [vmem:[#allocation5] sm:$0xff]
        %v307 = vld [vmem:[#allocation5 + $0x8] sm:$0xff]
        %v308 = vld [vmem:[#allocation5 + $0x10] sm:$0xff]
        %v309 = vld [vmem:[#allocation5 + $0x18] sm:$0xff]
        %v310 = vld [vmem:[#allocation5 + $0x20] sm:$0xff]
        %v311 = vld [vmem:[#allocation5 + $0x28] sm:$0xff]
        %v312 = vld [vmem:[#allocation5 + $0x30] sm:$0xff]
        %v313 = vld [vmem:[#allocation5 + $0x38] sm:$0xff]
        %v314 = vld [vmem:[#allocation5 + $0x40] sm:$0xff]
        %v315 = vld [vmem:[#allocation5 + $0x48] sm:$0xff]
        %v316 = vld [vmem:[#allocation5 + $0x50] sm:$0xff]
        %v317 = vld [vmem:[#allocation5 + $0x58] sm:$0xff]
        %v318 = vld [vmem:[#allocation5 + $0x60] sm:$0xff]
        %v319 = vld [vmem:[#allocation5 + $0x68] sm:$0xff]
        %v320 = vld [vmem:[#allocation5 + $0x70] sm:$0xff]
        %v321 = vld [vmem:[#allocation5 + $0x78] sm:$0xff]
        %v322 = vld [vmem:[%s2] sm:$0x1]
        %v324 = vlaneseq
        %v325 = vshrl.u32 %v324, 7
        %v326 = vsub.s32 0, %v325
        %v327 = vrot.slane %v322, %v326
        %329 = vmatprep.subr.mxu0 0.0
        %330 = vmatpush1.msra.mxu0 %v321
        %331 = vmatprep.subr.mxu0 0.0
        %332 = vmatpush1.msra.mxu0 %v320
        %333 = vmatprep.subr.mxu0 0.0
        %334 = vmatpush1.msra.mxu0 %v319
        %335 = vmatprep.subr.mxu0 0.0
        %336 = vmatpush1.msra.mxu0 %v318
        %337 = vmatprep.subr.mxu0 0.0
        %338 = vmatpush1.msra.mxu0 %v317
        %339 = vmatprep.subr.mxu0 0.0
        %340 = vmatpush1.msra.mxu0 %v316
        %341 = vmatprep.subr.mxu0 0.0
        %342 = vmatpush1.msra.mxu0 %v315
        %343 = vmatprep.subr.mxu0 0.0
        %344 = vmatpush1.msra.mxu0 %v314
        %345 = vmatprep.subr.mxu0 0.0
        %346 = vmatpush1.msra.mxu0 %v313
        %347 = vmatprep.subr.mxu0 0.0
        %348 = vmatpush1.msra.mxu0 %v312
        %349 = vmatprep.subr.mxu0 0.0
        %350 = vmatpush1.msra.mxu0 %v311
        %351 = vmatprep.subr.mxu0 0.0
        %352 = vmatpush1.msra.mxu0 %v310
        %353 = vmatprep.subr.mxu0 0.0
        %354 = vmatpush1.msra.mxu0 %v309
        %355 = vmatprep.subr.mxu0 0.0
        %356 = vmatpush1.msra.mxu0 %v308
        %357 = vmatprep.subr.mxu0 0.0
        %358 = vmatpush1.msra.mxu0 %v307
        %359 = vmatprep.subr.mxu0 0.0
        %360 = vmatpush1.msra.mxu0 %v306
        %361 = vmatprep.subr.mxu0 0.0
        %362 = vmatpush2.msra.mxu0 0.0
        %363 = vmatprep.subr.mxu0 0.0
        %364 = vmatpush2.msra.mxu0 0.0
        %365 = vmatprep.subr.mxu0 0.0
        %366 = vmatpush2.msra.mxu0 0.0
        %367 = vmatprep.subr.mxu0 0.0
        %368 = vmatpush2.msra.mxu0 0.0
        %369 = vmatprep.subr.mxu0 0.0
        %370 = vmatpush2.msra.mxu0 0.0
        %371 = vmatprep.subr.mxu0 0.0
        %372 = vmatpush2.msra.mxu0 0.0
        %373 = vmatprep.subr.mxu0 0.0
        %374 = vmatpush2.msra.mxu0 0.0
        %375 = vmatprep.subr.mxu0 0.0
        %376 = vmatpush2.msra.mxu0 0.0
        %377 = vmatprep.subr.mxu0 0.0
        %378 = vmatpush2.msra.mxu0 0.0
        %379 = vmatprep.subr.mxu0 0.0
        %380 = vmatpush2.msra.mxu0 0.0
        %381 = vmatprep.subr.mxu0 0.0
        %382 = vmatpush2.msra.mxu0 0.0
        %383 = vmatprep.subr.mxu0 0.0
        %384 = vmatpush2.msra.mxu0 0.0
        %385 = vmatprep.subr.mxu0 0.0
        %386 = vmatpush2.msra.mxu0 0.0
        %387 = vmatprep.subr.mxu0 0.0
        %388 = vmatpush2.msra.mxu0 0.0
        %389 = vmatprep.subr.mxu0 0.0
        %390 = vmatpush2.msra.mxu0 0.0
        %391 = vmatprep.subr.mxu0 0.0
        %392 = vmatpush2.msra.mxu0 0.0
        %393 = vmatprep.mubr.f32.mxu0 0.0
        %394 = vmatmul.mubr.f32.gmra.mxu0 %v274
        %v395 = vpop.f32.mrf.mxu0
        %v396 = vadd.f32 %v327, %v395
        %v397 = vpop.f32.mrf.mxu0
        %398 = vmatprep.mubr.f32.mxu0 0.0
        %399 = vmatmul.mubr.f32.gmra.mxu0 %v275
        %v400 = vpop.f32.mrf.mxu0
        %v401 = vadd.f32 %v327, %v400
        %v402 = vpop.f32.mrf.mxu0
        %403 = vmatprep.mubr.f32.mxu0 0.0
        %404 = vmatmul.mubr.f32.gmra.mxu0 %v276
        %v405 = vpop.f32.mrf.mxu0
        %v406 = vadd.f32 %v327, %v405
        %v407 = vpop.f32.mrf.mxu0
        %408 = vmatprep.mubr.f32.mxu0 0.0
        %409 = vmatmul.mubr.f32.gmra.mxu0 %v277
        %v410 = vpop.f32.mrf.mxu0
        %v411 = vadd.f32 %v327, %v410
        %v412 = vpop.f32.mrf.mxu0
        %413 = vmatprep.mubr.f32.mxu0 0.0
        %414 = vmatmul.mubr.f32.gmra.mxu0 %v278
        %v415 = vpop.f32.mrf.mxu0
        %v416 = vadd.f32 %v327, %v415
        %v417 = vpop.f32.mrf.mxu0
        %418 = vmatprep.mubr.f32.mxu0 0.0
        %419 = vmatmul.mubr.f32.gmra.mxu0 %v279
        %v420 = vpop.f32.mrf.mxu0
        %v421 = vadd.f32 %v327, %v420
        %v422 = vpop.f32.mrf.mxu0
        %423 = vmatprep.mubr.f32.mxu0 0.0
        %424 = vmatmul.mubr.f32.gmra.mxu0 %v280
        %v425 = vpop.f32.mrf.mxu0
        %v426 = vadd.f32 %v327, %v425
        %v427 = vpop.f32.mrf.mxu0
        %428 = vmatprep.mubr.f32.mxu0 0.0
        %429 = vmatmul.mubr.f32.gmra.mxu0 %v281
        %v430 = vpop.f32.mrf.mxu0
        %v431 = vadd.f32 %v327, %v430
        %v432 = vpop.f32.mrf.mxu0
        %433 = vmatprep.mubr.f32.mxu0 0.0
        %434 = vmatmul.mubr.f32.gmra.mxu0 %v282
        %v435 = vpop.f32.mrf.mxu0
        %v436 = vadd.f32 %v327, %v435
        %v437 = vpop.f32.mrf.mxu0
        %438 = vmatprep.mubr.f32.mxu0 0.0
        %439 = vmatmul.mubr.f32.gmra.mxu0 %v283
        %v440 = vpop.f32.mrf.mxu0
        %v441 = vadd.f32 %v327, %v440
        %v442 = vpop.f32.mrf.mxu0
        %443 = vmatprep.mubr.f32.mxu0 0.0
        %444 = vmatmul.mubr.f32.gmra.mxu0 %v284
        %v445 = vpop.f32.mrf.mxu0
        %v446 = vadd.f32 %v327, %v445
        %v447 = vpop.f32.mrf.mxu0
        %448 = vmatprep.mubr.f32.mxu0 0.0
        %449 = vmatmul.mubr.f32.gmra.mxu0 %v285
        %v450 = vpop.f32.mrf.mxu0
        %v451 = vadd.f32 %v327, %v450
        %v452 = vpop.f32.mrf.mxu0
        %453 = vmatprep.mubr.f32.mxu0 0.0
        %454 = vmatmul.mubr.f32.gmra.mxu0 %v286
        %v455 = vpop.f32.mrf.mxu0
        %v456 = vadd.f32 %v327, %v455
        %v457 = vpop.f32.mrf.mxu0
        %458 = vmatprep.mubr.f32.mxu0 0.0
        %459 = vmatmul.mubr.f32.gmra.mxu0 %v287
        %v460 = vpop.f32.mrf.mxu0
        %v461 = vadd.f32 %v327, %v460
        %v462 = vpop.f32.mrf.mxu0
        %463 = vmatprep.mubr.f32.mxu0 0.0
        %464 = vmatmul.mubr.f32.gmra.mxu0 %v288
        %v465 = vpop.f32.mrf.mxu0
        %v466 = vadd.f32 %v327, %v465
        %v467 = vpop.f32.mrf.mxu0
        %468 = vmatprep.mubr.f32.mxu0 0.0
        %469 = vmatmul.mubr.f32.gmra.mxu0 %v289
        %v470 = vpop.f32.mrf.mxu0
        %v471 = vadd.f32 %v327, %v470
        %v472 = vpop.f32.mrf.mxu0
        %473 = vmatprep.mubr.f32.mxu0 0.0
        %474 = vmatmul.mubr.f32.gmra.mxu0 %v290
        %v475 = vpop.f32.mrf.mxu0
        %v476 = vadd.f32 %v327, %v475
        %v477 = vpop.f32.mrf.mxu0
        %478 = vmatprep.mubr.f32.mxu0 0.0
        %479 = vmatmul.mubr.f32.gmra.mxu0 %v291
        %v480 = vpop.f32.mrf.mxu0
        %v481 = vadd.f32 %v327, %v480
        %v482 = vpop.f32.mrf.mxu0
        %483 = vmatprep.mubr.f32.mxu0 0.0
        %484 = vmatmul.mubr.f32.gmra.mxu0 %v292
        %v485 = vpop.f32.mrf.mxu0
        %v486 = vadd.f32 %v327, %v485
        %v487 = vpop.f32.mrf.mxu0
        %488 = vmatprep.mubr.f32.mxu0 0.0
        %489 = vmatmul.mubr.f32.gmra.mxu0 %v293
        %v490 = vpop.f32.mrf.mxu0
        %v491 = vadd.f32 %v327, %v490
        %v492 = vpop.f32.mrf.mxu0
        %493 = vmatprep.mubr.f32.mxu0 0.0
        %494 = vmatmul.mubr.f32.gmra.mxu0 %v294
        %v495 = vpop.f32.mrf.mxu0
        %v496 = vadd.f32 %v327, %v495
        %v497 = vpop.f32.mrf.mxu0
        %498 = vmatprep.mubr.f32.mxu0 0.0
        %499 = vmatmul.mubr.f32.gmra.mxu0 %v295
        %v500 = vpop.f32.mrf.mxu0
        %v501 = vadd.f32 %v327, %v500
        %v502 = vpop.f32.mrf.mxu0
        %503 = vmatprep.mubr.f32.mxu0 0.0
        %504 = vmatmul.mubr.f32.gmra.mxu0 %v296
        %v505 = vpop.f32.mrf.mxu0
        %v506 = vadd.f32 %v327, %v505
        %v507 = vpop.f32.mrf.mxu0
        %508 = vmatprep.mubr.f32.mxu0 0.0
        %509 = vmatmul.mubr.f32.gmra.mxu0 %v297
        %v510 = vpop.f32.mrf.mxu0
        %v511 = vadd.f32 %v327, %v510
        %v512 = vpop.f32.mrf.mxu0
        %513 = vmatprep.mubr.f32.mxu0 0.0
        %514 = vmatmul.mubr.f32.gmra.mxu0 %v298
        %v515 = vpop.f32.mrf.mxu0
        %v516 = vadd.f32 %v327, %v515
        %v517 = vpop.f32.mrf.mxu0
        %518 = vmatprep.mubr.f32.mxu0 0.0
        %519 = vmatmul.mubr.f32.gmra.mxu0 %v299
        %v520 = vpop.f32.mrf.mxu0
        %v521 = vadd.f32 %v327, %v520
        %v522 = vpop.f32.mrf.mxu0
        %523 = vmatprep.mubr.f32.mxu0 0.0
        %524 = vmatmul.mubr.f32.gmra.mxu0 %v300
        %v525 = vpop.f32.mrf.mxu0
        %v526 = vadd.f32 %v327, %v525
        %v527 = vpop.f32.mrf.mxu0
        %528 = vmatprep.mubr.f32.mxu0 0.0
        %529 = vmatmul.mubr.f32.gmra.mxu0 %v301
        %v530 = vpop.f32.mrf.mxu0
        %v531 = vadd.f32 %v327, %v530
        %v532 = vpop.f32.mrf.mxu0
        %533 = vmatprep.mubr.f32.mxu0 0.0
        %534 = vmatmul.mubr.f32.gmra.mxu0 %v302
        %v535 = vpop.f32.mrf.mxu0
        %v536 = vadd.f32 %v327, %v535
        %v537 = vpop.f32.mrf.mxu0
        %538 = vmatprep.mubr.f32.mxu0 0.0
        %539 = vmatmul.mubr.f32.gmra.mxu0 %v303
        %v540 = vpop.f32.mrf.mxu0
        %v541 = vadd.f32 %v327, %v540
        %v542 = vpop.f32.mrf.mxu0
        %543 = vmatprep.mubr.f32.mxu0 0.0
        %544 = vmatmul.mubr.f32.gmra.mxu0 %v304
        %v545 = vpop.f32.mrf.mxu0
        %v546 = vadd.f32 %v327, %v545
        %v547 = vpop.f32.mrf.mxu0
        %548 = vmatprep.mubr.f32.mxu0 0.0
        %549 = vmatmul.mubr.f32.gmra.mxu0 %v305
        %v550 = vpop.f32.mrf.mxu0
        %v551 = vadd.f32 %v327, %v550
        %v552 = vpop.f32.mrf.mxu0
        %553 = vdwg.mxu0
        %v554 = vmax.f32 %v396, 0.0
        %v555 = vmax.f32 %v401, 0.0
        %v556 = vmax.f32 %v406, 0.0
        %v557 = vmax.f32 %v411, 0.0
        %v558 = vmax.f32 %v416, 0.0
        %v559 = vmax.f32 %v421, 0.0
        %v560 = vmax.f32 %v426, 0.0
        %v561 = vmax.f32 %v431, 0.0
        %v562 = vmax.f32 %v436, 0.0
        %v563 = vmax.f32 %v441, 0.0
        %v564 = vmax.f32 %v446, 0.0
        %v565 = vmax.f32 %v451, 0.0
        %v566 = vmax.f32 %v456, 0.0
        %v567 = vmax.f32 %v461, 0.0
        %v568 = vmax.f32 %v466, 0.0
        %v569 = vmax.f32 %v471, 0.0
        %v570 = vmax.f32 %v476, 0.0
        %v571 = vmax.f32 %v481, 0.0
        %v572 = vmax.f32 %v486, 0.0
        %v573 = vmax.f32 %v491, 0.0
        %v574 = vmax.f32 %v496, 0.0
        %v575 = vmax.f32 %v501, 0.0
        %v576 = vmax.f32 %v506, 0.0
        %v577 = vmax.f32 %v511, 0.0
        %v578 = vmax.f32 %v516, 0.0
        %v579 = vmax.f32 %v521, 0.0
        %v580 = vmax.f32 %v526, 0.0
        %v581 = vmax.f32 %v531, 0.0
        %v582 = vmax.f32 %v536, 0.0
        %v583 = vmax.f32 %v541, 0.0
        %v584 = vmax.f32 %v546, 0.0
        %v585 = vmax.f32 %v551, 0.0
        %v586 = vld [vmem:[#allocation7] sm:$0xff]
        %v587 = vld [vmem:[#allocation7 + $0x8] sm:$0xff]
        %v588 = vld [vmem:[#allocation7 + $0x10] sm:$0xff]
        %v589 = vld [vmem:[#allocation7 + $0x18] sm:$0xff]
        %v590 = vld [vmem:[#allocation7 + $0x20] sm:$0xff]
        %v591 = vld [vmem:[#allocation7 + $0x28] sm:$0xff]
        %v592 = vld [vmem:[#allocation7 + $0x30] sm:$0xff]
        %v593 = vld [vmem:[#allocation7 + $0x38] sm:$0xff]
        %v594 = vld [vmem:[#allocation7 + $0x40] sm:$0xff]
        %v595 = vld [vmem:[#allocation7 + $0x48] sm:$0xff]
        %v596 = vld [vmem:[#allocation7 + $0x50] sm:$0xff]
        %v597 = vld [vmem:[#allocation7 + $0x58] sm:$0xff]
        %v598 = vld [vmem:[#allocation7 + $0x60] sm:$0xff]
        %v599 = vld [vmem:[#allocation7 + $0x68] sm:$0xff]
        %v600 = vld [vmem:[#allocation7 + $0x70] sm:$0xff]
        %v601 = vld [vmem:[#allocation7 + $0x78] sm:$0xff]
        %v602 = vld [vmem:[%s4] sm:$0x1]
        %v604 = vlaneseq
        %v605 = vshrl.u32 %v604, 7
        %v606 = vsub.s32 0, %v605
        %v607 = vrot.slane %v602, %v606
        %609 = vmatprep.subr.mxu0 0.0
        %610 = vmatpush1.msra.mxu0 %v601
        %611 = vmatprep.subr.mxu0 0.0
        %612 = vmatpush1.msra.mxu0 %v600
        %613 = vmatprep.subr.mxu0 0.0
        %614 = vmatpush1.msra.mxu0 %v599
        %615 = vmatprep.subr.mxu0 0.0
        %616 = vmatpush1.msra.mxu0 %v598
        %617 = vmatprep.subr.mxu0 0.0
        %618 = vmatpush1.msra.mxu0 %v597
        %619 = vmatprep.subr.mxu0 0.0
        %620 = vmatpush1.msra.mxu0 %v596
        %621 = vmatprep.subr.mxu0 0.0
        %622 = vmatpush1.msra.mxu0 %v595
        %623 = vmatprep.subr.mxu0 0.0
        %624 = vmatpush1.msra.mxu0 %v594
        %625 = vmatprep.subr.mxu0 0.0
        %626 = vmatpush1.msra.mxu0 %v593
        %627 = vmatprep.subr.mxu0 0.0
        %628 = vmatpush1.msra.mxu0 %v592
        %629 = vmatprep.subr.mxu0 0.0
        %630 = vmatpush1.msra.mxu0 %v591
        %631 = vmatprep.subr.mxu0 0.0
        %632 = vmatpush1.msra.mxu0 %v590
        %633 = vmatprep.subr.mxu0 0.0
        %634 = vmatpush1.msra.mxu0 %v589
        %635 = vmatprep.subr.mxu0 0.0
        %636 = vmatpush1.msra.mxu0 %v588
        %637 = vmatprep.subr.mxu0 0.0
        %638 = vmatpush1.msra.mxu0 %v587
        %639 = vmatprep.subr.mxu0 0.0
        %640 = vmatpush1.msra.mxu0 %v586
        %641 = vmatprep.subr.mxu0 0.0
        %642 = vmatpush2.msra.mxu0 0.0
        %643 = vmatprep.subr.mxu0 0.0
        %644 = vmatpush2.msra.mxu0 0.0
        %645 = vmatprep.subr.mxu0 0.0
        %646 = vmatpush2.msra.mxu0 0.0
        %647 = vmatprep.subr.mxu0 0.0
        %648 = vmatpush2.msra.mxu0 0.0
        %649 = vmatprep.subr.mxu0 0.0
        %650 = vmatpush2.msra.mxu0 0.0
        %651 = vmatprep.subr.mxu0 0.0
        %652 = vmatpush2.msra.mxu0 0.0
        %653 = vmatprep.subr.mxu0 0.0
        %654 = vmatpush2.msra.mxu0 0.0
        %655 = vmatprep.subr.mxu0 0.0
        %656 = vmatpush2.msra.mxu0 0.0
        %657 = vmatprep.subr.mxu0 0.0
        %658 = vmatpush2.msra.mxu0 0.0
        %659 = vmatprep.subr.mxu0 0.0
        %660 = vmatpush2.msra.mxu0 0.0
        %661 = vmatprep.subr.mxu0 0.0
        %662 = vmatpush2.msra.mxu0 0.0
        %663 = vmatprep.subr.mxu0 0.0
        %664 = vmatpush2.msra.mxu0 0.0
        %665 = vmatprep.subr.mxu0 0.0
        %666 = vmatpush2.msra.mxu0 0.0
        %667 = vmatprep.subr.mxu0 0.0
        %668 = vmatpush2.msra.mxu0 0.0
        %669 = vmatprep.subr.mxu0 0.0
        %670 = vmatpush2.msra.mxu0 0.0
        %671 = vmatprep.subr.mxu0 0.0
        %672 = vmatpush2.msra.mxu0 0.0
        %673 = vmatprep.mubr.f32.mxu0 0.0
        %674 = vmatmul.mubr.f32.gmra.mxu0 %v554
        %v675 = vpop.f32.mrf.mxu0
        %v676 = vadd.f32 %v607, %v675
        %v677 = vpop.f32.mrf.mxu0
        %678 = vmatprep.mubr.f32.mxu0 0.0
        %679 = vmatmul.mubr.f32.gmra.mxu0 %v555
        %v680 = vpop.f32.mrf.mxu0
        %v681 = vadd.f32 %v607, %v680
        %v682 = vpop.f32.mrf.mxu0
        %683 = vmatprep.mubr.f32.mxu0 0.0
        %684 = vmatmul.mubr.f32.gmra.mxu0 %v556
        %v685 = vpop.f32.mrf.mxu0
        %v686 = vadd.f32 %v607, %v685
        %v687 = vpop.f32.mrf.mxu0
        %688 = vmatprep.mubr.f32.mxu0 0.0
        %689 = vmatmul.mubr.f32.gmra.mxu0 %v557
        %v690 = vpop.f32.mrf.mxu0
        %v691 = vadd.f32 %v607, %v690
        %v692 = vpop.f32.mrf.mxu0
        %693 = vmatprep.mubr.f32.mxu0 0.0
        %694 = vmatmul.mubr.f32.gmra.mxu0 %v558
        %v695 = vpop.f32.mrf.mxu0
        %v696 = vadd.f32 %v607, %v695
        %v697 = vpop.f32.mrf.mxu0
        %698 = vmatprep.mubr.f32.mxu0 0.0
        %699 = vmatmul.mubr.f32.gmra.mxu0 %v559
        %v700 = vpop.f32.mrf.mxu0
        %v701 = vadd.f32 %v607, %v700
        %v702 = vpop.f32.mrf.mxu0
        %703 = vmatprep.mubr.f32.mxu0 0.0
        %704 = vmatmul.mubr.f32.gmra.mxu0 %v560
        %v705 = vpop.f32.mrf.mxu0
        %v706 = vadd.f32 %v607, %v705
        %v707 = vpop.f32.mrf.mxu0
        %708 = vmatprep.mubr.f32.mxu0 0.0
        %709 = vmatmul.mubr.f32.gmra.mxu0 %v561
        %v710 = vpop.f32.mrf.mxu0
        %v711 = vadd.f32 %v607, %v710
        %v712 = vpop.f32.mrf.mxu0
        %713 = vmatprep.mubr.f32.mxu0 0.0
        %714 = vmatmul.mubr.f32.gmra.mxu0 %v562
        %v715 = vpop.f32.mrf.mxu0
        %v716 = vadd.f32 %v607, %v715
        %v717 = vpop.f32.mrf.mxu0
        %718 = vmatprep.mubr.f32.mxu0 0.0
        %719 = vmatmul.mubr.f32.gmra.mxu0 %v563
        %v720 = vpop.f32.mrf.mxu0
        %v721 = vadd.f32 %v607, %v720
        %v722 = vpop.f32.mrf.mxu0
        %723 = vmatprep.mubr.f32.mxu0 0.0
        %724 = vmatmul.mubr.f32.gmra.mxu0 %v564
        %v725 = vpop.f32.mrf.mxu0
        %v726 = vadd.f32 %v607, %v725
        %v727 = vpop.f32.mrf.mxu0
        %728 = vmatprep.mubr.f32.mxu0 0.0
        %729 = vmatmul.mubr.f32.gmra.mxu0 %v565
        %v730 = vpop.f32.mrf.mxu0
        %v731 = vadd.f32 %v607, %v730
        %v732 = vpop.f32.mrf.mxu0
        %733 = vmatprep.mubr.f32.mxu0 0.0
        %734 = vmatmul.mubr.f32.gmra.mxu0 %v566
        %v735 = vpop.f32.mrf.mxu0
        %v736 = vadd.f32 %v607, %v735
        %v737 = vpop.f32.mrf.mxu0
        %738 = vmatprep.mubr.f32.mxu0 0.0
        %739 = vmatmul.mubr.f32.gmra.mxu0 %v567
        %v740 = vpop.f32.mrf.mxu0
        %v741 = vadd.f32 %v607, %v740
        %v742 = vpop.f32.mrf.mxu0
        %743 = vmatprep.mubr.f32.mxu0 0.0
        %744 = vmatmul.mubr.f32.gmra.mxu0 %v568
        %v745 = vpop.f32.mrf.mxu0
        %v746 = vadd.f32 %v607, %v745
        %v747 = vpop.f32.mrf.mxu0
        %748 = vmatprep.mubr.f32.mxu0 0.0
        %749 = vmatmul.mubr.f32.gmra.mxu0 %v569
        %v750 = vpop.f32.mrf.mxu0
        %v751 = vadd.f32 %v607, %v750
        %v752 = vpop.f32.mrf.mxu0
        %753 = vmatprep.mubr.f32.mxu0 0.0
        %754 = vmatmul.mubr.f32.gmra.mxu0 %v570
        %v755 = vpop.f32.mrf.mxu0
        %v756 = vadd.f32 %v607, %v755
        %v757 = vpop.f32.mrf.mxu0
        %758 = vmatprep.mubr.f32.mxu0 0.0
        %759 = vmatmul.mubr.f32.gmra.mxu0 %v571
        %v760 = vpop.f32.mrf.mxu0
        %v761 = vadd.f32 %v607, %v760
        %v762 = vpop.f32.mrf.mxu0
        %763 = vmatprep.mubr.f32.mxu0 0.0
        %764 = vmatmul.mubr.f32.gmra.mxu0 %v572
        %v765 = vpop.f32.mrf.mxu0
        %v766 = vadd.f32 %v607, %v765
        %v767 = vpop.f32.mrf.mxu0
        %768 = vmatprep.mubr.f32.mxu0 0.0
        %769 = vmatmul.mubr.f32.gmra.mxu0 %v573
        %v770 = vpop.f32.mrf.mxu0
        %v771 = vadd.f32 %v607, %v770
        %v772 = vpop.f32.mrf.mxu0
        %773 = vmatprep.mubr.f32.mxu0 0.0
        %774 = vmatmul.mubr.f32.gmra.mxu0 %v574
        %v775 = vpop.f32.mrf.mxu0
        %v776 = vadd.f32 %v607, %v775
        %v777 = vpop.f32.mrf.mxu0
        %778 = vmatprep.mubr.f32.mxu0 0.0
        %779 = vmatmul.mubr.f32.gmra.mxu0 %v575
        %v780 = vpop.f32.mrf.mxu0
        %v781 = vadd.f32 %v607, %v780
        %v782 = vpop.f32.mrf.mxu0
        %783 = vmatprep.mubr.f32.mxu0 0.0
        %784 = vmatmul.mubr.f32.gmra.mxu0 %v576
        %v785 = vpop.f32.mrf.mxu0
        %v786 = vadd.f32 %v607, %v785
        %v787 = vpop.f32.mrf.mxu0
        %788 = vmatprep.mubr.f32.mxu0 0.0
        %789 = vmatmul.mubr.f32.gmra.mxu0 %v577
        %v790 = vpop.f32.mrf.mxu0
        %v791 = vadd.f32 %v607, %v790
        %v792 = vpop.f32.mrf.mxu0
        %793 = vmatprep.mubr.f32.mxu0 0.0
        %794 = vmatmul.mubr.f32.gmra.mxu0 %v578
        %v795 = vpop.f32.mrf.mxu0
        %v796 = vadd.f32 %v607, %v795
        %v797 = vpop.f32.mrf.mxu0
        %798 = vmatprep.mubr.f32.mxu0 0.0
        %799 = vmatmul.mubr.f32.gmra.mxu0 %v579
        %v800 = vpop.f32.mrf.mxu0
        %v801 = vadd.f32 %v607, %v800
        %v802 = vpop.f32.mrf.mxu0
        %803 = vmatprep.mubr.f32.mxu0 0.0
        %804 = vmatmul.mubr.f32.gmra.mxu0 %v580
        %v805 = vpop.f32.mrf.mxu0
        %v806 = vadd.f32 %v607, %v805
        %v807 = vpop.f32.mrf.mxu0
        %808 = vmatprep.mubr.f32.mxu0 0.0
        %809 = vmatmul.mubr.f32.gmra.mxu0 %v581
        %v810 = vpop.f32.mrf.mxu0
        %v811 = vadd.f32 %v607, %v810
        %v812 = vpop.f32.mrf.mxu0
        %813 = vmatprep.mubr.f32.mxu0 0.0
        %814 = vmatmul.mubr.f32.gmra.mxu0 %v582
        %v815 = vpop.f32.mrf.mxu0
        %v816 = vadd.f32 %v607, %v815
        %v817 = vpop.f32.mrf.mxu0
        %818 = vmatprep.mubr.f32.mxu0 0.0
        %819 = vmatmul.mubr.f32.gmra.mxu0 %v583
        %v820 = vpop.f32.mrf.mxu0
        %v821 = vadd.f32 %v607, %v820
        %v822 = vpop.f32.mrf.mxu0
        %823 = vmatprep.mubr.f32.mxu0 0.0
        %824 = vmatmul.mubr.f32.gmra.mxu0 %v584
        %v825 = vpop.f32.mrf.mxu0
        %v826 = vadd.f32 %v607, %v825
        %v827 = vpop.f32.mrf.mxu0
        %828 = vmatprep.mubr.f32.mxu0 0.0
        %829 = vmatmul.mubr.f32.gmra.mxu0 %v585
        %v830 = vpop.f32.mrf.mxu0
        %v831 = vadd.f32 %v607, %v830
        %v832 = vpop.f32.mrf.mxu0
        %833 = vdwg.mxu0
        %v834 = vxor.u32 %v676, 2147483648
        %v835 = vxor.u32 %v681, 2147483648
        %v836 = vxor.u32 %v686, 2147483648
        %v837 = vxor.u32 %v691, 2147483648
        %v838 = vxor.u32 %v696, 2147483648
        %v839 = vxor.u32 %v701, 2147483648
        %v840 = vxor.u32 %v706, 2147483648
        %v841 = vxor.u32 %v711, 2147483648
        %v842 = vxor.u32 %v716, 2147483648
        %v843 = vxor.u32 %v721, 2147483648
        %v844 = vxor.u32 %v726, 2147483648
        %v845 = vxor.u32 %v731, 2147483648
        %v846 = vxor.u32 %v736, 2147483648
        %v847 = vxor.u32 %v741, 2147483648
        %v848 = vxor.u32 %v746, 2147483648
        %v849 = vxor.u32 %v751, 2147483648
        %v850 = vxor.u32 %v756, 2147483648
        %v851 = vxor.u32 %v761, 2147483648
        %v852 = vxor.u32 %v766, 2147483648
        %v853 = vxor.u32 %v771, 2147483648
        %v854 = vxor.u32 %v776, 2147483648
        %v855 = vxor.u32 %v781, 2147483648
        %v856 = vxor.u32 %v786, 2147483648
        %v857 = vxor.u32 %v791, 2147483648
        %v858 = vxor.u32 %v796, 2147483648
        %v859 = vxor.u32 %v801, 2147483648
        %v860 = vxor.u32 %v806, 2147483648
        %v861 = vxor.u32 %v811, 2147483648
        %v862 = vxor.u32 %v816, 2147483648
        %v863 = vxor.u32 %v821, 2147483648
        %v864 = vxor.u32 %v826, 2147483648
        %v865 = vxor.u32 %v831, 2147483648
        %v866 = vmul.f32 %v834, 1.442695
        %v867 = vpow.pop %v866
        %v868 = vmul.f32 %v835, 1.442695
        %v869 = vpow.pop %v868
        %v870 = vmul.f32 %v836, 1.442695
        %v871 = vpow.pop %v870
        %v872 = vmul.f32 %v837, 1.442695
        %v873 = vpow.pop %v872
        %v874 = vmul.f32 %v838, 1.442695
        %v875 = vpow.pop %v874
        %v876 = vmul.f32 %v839, 1.442695
        %v877 = vpow.pop %v876
        %v878 = vmul.f32 %v840, 1.442695
        %v879 = vpow.pop %v878
        %v880 = vmul.f32 %v841, 1.442695
        %v881 = vpow.pop %v880
        %v882 = vmul.f32 %v842, 1.442695
        %v883 = vpow.pop %v882
        %v884 = vmul.f32 %v843, 1.442695
        %v885 = vpow.pop %v884
        %v886 = vmul.f32 %v844, 1.442695
        %v887 = vpow.pop %v886
        %v888 = vmul.f32 %v845, 1.442695
        %v889 = vpow.pop %v888
        %v890 = vmul.f32 %v846, 1.442695
        %v891 = vpow.pop %v890
        %v892 = vmul.f32 %v847, 1.442695
        %v893 = vpow.pop %v892
        %v894 = vmul.f32 %v848, 1.442695
        %v895 = vpow.pop %v894
        %v896 = vmul.f32 %v849, 1.442695
        %v897 = vpow.pop %v896
        %v898 = vmul.f32 %v850, 1.442695
        %v899 = vpow.pop %v898
        %v900 = vmul.f32 %v851, 1.442695
        %v901 = vpow.pop %v900
        %v902 = vmul.f32 %v852, 1.442695
        %v903 = vpow.pop %v902
        %v904 = vmul.f32 %v853, 1.442695
        %v905 = vpow.pop %v904
        %v906 = vmul.f32 %v854, 1.442695
        %v907 = vpow.pop %v906
        %v908 = vmul.f32 %v855, 1.442695
        %v909 = vpow.pop %v908
        %v910 = vmul.f32 %v856, 1.442695
        %v911 = vpow.pop %v910
        %v912 = vmul.f32 %v857, 1.442695
        %v913 = vpow.pop %v912
        %v914 = vmul.f32 %v858, 1.442695
        %v915 = vpow.pop %v914
        %v916 = vmul.f32 %v859, 1.442695
        %v917 = vpow.pop %v916
        %v918 = vmul.f32 %v860, 1.442695
        %v919 = vpow.pop %v918
        %v920 = vmul.f32 %v861, 1.442695
        %v921 = vpow.pop %v920
        %v922 = vmul.f32 %v862, 1.442695
        %v923 = vpow.pop %v922
        %v924 = vmul.f32 %v863, 1.442695
        %v925 = vpow.pop %v924
        %v926 = vmul.f32 %v864, 1.442695
        %v927 = vpow.pop %v926
        %v928 = vmul.f32 %v865, 1.442695
        %v929 = vpow.pop %v928
        %v930 = vadd.f32 %v867, 1.0
        %v931 = vadd.f32 %v869, 1.0
        %v932 = vadd.f32 %v871, 1.0
        %v933 = vadd.f32 %v873, 1.0
        %v934 = vadd.f32 %v875, 1.0
        %v935 = vadd.f32 %v877, 1.0
        %v936 = vadd.f32 %v879, 1.0
        %v937 = vadd.f32 %v881, 1.0
        %v938 = vadd.f32 %v883, 1.0
        %v939 = vadd.f32 %v885, 1.0
        %v940 = vadd.f32 %v887, 1.0
        %v941 = vadd.f32 %v889, 1.0
        %v942 = vadd.f32 %v891, 1.0
        %v943 = vadd.f32 %v893, 1.0
        %v944 = vadd.f32 %v895, 1.0
        %v945 = vadd.f32 %v897, 1.0
        %v946 = vadd.f32 %v899, 1.0
        %v947 = vadd.f32 %v901, 1.0
        %v948 = vadd.f32 %v903, 1.0
        %v949 = vadd.f32 %v905, 1.0
        %v950 = vadd.f32 %v907, 1.0
        %v951 = vadd.f32 %v909, 1.0
        %v952 = vadd.f32 %v911, 1.0
        %v953 = vadd.f32 %v913, 1.0
        %v954 = vadd.f32 %v915, 1.0
        %v955 = vadd.f32 %v917, 1.0
        %v956 = vadd.f32 %v919, 1.0
        %v957 = vadd.f32 %v921, 1.0
        %v958 = vadd.f32 %v923, 1.0
        %v959 = vadd.f32 %v925, 1.0
        %v960 = vadd.f32 %v927, 1.0
        %v961 = vadd.f32 %v929, 1.0
        %v962 = vrcp.pop %v930
        %v963 = vmul.f32 1.0, %v962
        %v964 = vrcp.pop %v931
        %v965 = vmul.f32 1.0, %v964
        %v966 = vrcp.pop %v932
        %v967 = vmul.f32 1.0, %v966
        %v968 = vrcp.pop %v933
        %v969 = vmul.f32 1.0, %v968
        %v970 = vrcp.pop %v934
        %v971 = vmul.f32 1.0, %v970
        %v972 = vrcp.pop %v935
        %v973 = vmul.f32 1.0, %v972
        %v974 = vrcp.pop %v936
        %v975 = vmul.f32 1.0, %v974
        %v976 = vrcp.pop %v937
        %v977 = vmul.f32 1.0, %v976
        %v978 = vrcp.pop %v938
        %v979 = vmul.f32 1.0, %v978
        %v980 = vrcp.pop %v939
        %v981 = vmul.f32 1.0, %v980
        %v982 = vrcp.pop %v940
        %v983 = vmul.f32 1.0, %v982
        %v984 = vrcp.pop %v941
        %v985 = vmul.f32 1.0, %v984
        %v986 = vrcp.pop %v942
        %v987 = vmul.f32 1.0, %v986
        %v988 = vrcp.pop %v943
        %v989 = vmul.f32 1.0, %v988
        %v990 = vrcp.pop %v944
        %v991 = vmul.f32 1.0, %v990
        %v992 = vrcp.pop %v945
        %v993 = vmul.f32 1.0, %v992
        %v994 = vrcp.pop %v946
        %v995 = vmul.f32 1.0, %v994
        %v996 = vrcp.pop %v947
        %v997 = vmul.f32 1.0, %v996
        %v998 = vrcp.pop %v948
        %v999 = vmul.f32 1.0, %v998
        %v1000 = vrcp.pop %v949
        %v1001 = vmul.f32 1.0, %v1000
        %v1002 = vrcp.pop %v950
        %v1003 = vmul.f32 1.0, %v1002
        %v1004 = vrcp.pop %v951
        %v1005 = vmul.f32 1.0, %v1004
        %v1006 = vrcp.pop %v952
        %v1007 = vmul.f32 1.0, %v1006
        %v1008 = vrcp.pop %v953
        %v1009 = vmul.f32 1.0, %v1008
        %v1010 = vrcp.pop %v954
        %v1011 = vmul.f32 1.0, %v1010
        %v1012 = vrcp.pop %v955
        %v1013 = vmul.f32 1.0, %v1012
        %v1014 = vrcp.pop %v956
        %v1015 = vmul.f32 1.0, %v1014
        %v1016 = vrcp.pop %v957
        %v1017 = vmul.f32 1.0, %v1016
        %v1018 = vrcp.pop %v958
        %v1019 = vmul.f32 1.0, %v1018
        %v1020 = vrcp.pop %v959
        %v1021 = vmul.f32 1.0, %v1020
        %v1022 = vrcp.pop %v960
        %v1023 = vmul.f32 1.0, %v1022
        %v1024 = vrcp.pop %v961
        %v1025 = vmul.f32 1.0, %v1024
        %1026 = vst [vmem:[%s271] sm:$0xff] %v963
        %1027 = vst [vmem:[%s271 + $0x8] sm:$0xff] %v965
        %1028 = vst [vmem:[%s271 + $0x10] sm:$0xff] %v967
        %1029 = vst [vmem:[%s271 + $0x18] sm:$0xff] %v969
        %1030 = vst [vmem:[%s271 + $0x20] sm:$0xff] %v971
        %1031 = vst [vmem:[%s271 + $0x28] sm:$0xff] %v973
        %1032 = vst [vmem:[%s271 + $0x30] sm:$0xff] %v975
        %1033 = vst [vmem:[%s271 + $0x38] sm:$0xff] %v977
        %1034 = vst [vmem:[%s271 + $0x40] sm:$0xff] %v979
        %1035 = vst [vmem:[%s271 + $0x48] sm:$0xff] %v981
        %1036 = vst [vmem:[%s271 + $0x50] sm:$0xff] %v983
        %1037 = vst [vmem:[%s271 + $0x58] sm:$0xff] %v985
        %1038 = vst [vmem:[%s271 + $0x60] sm:$0xff] %v987
        %1039 = vst [vmem:[%s271 + $0x68] sm:$0xff] %v989
        %1040 = vst [vmem:[%s271 + $0x70] sm:$0xff] %v991
        %1041 = vst [vmem:[%s271 + $0x78] sm:$0xff] %v993
        %1042 = vst [vmem:[%s271 + $0x80] sm:$0xff] %v995
        %1043 = vst [vmem:[%s271 + $0x88] sm:$0xff] %v997
        %1044 = vst [vmem:[%s271 + $0x90] sm:$0xff] %v999
        %1045 = vst [vmem:[%s271 + $0x98] sm:$0xff] %v1001
        %1046 = vst [vmem:[%s271 + $0xa0] sm:$0xff] %v1003
        %1047 = vst [vmem:[%s271 + $0xa8] sm:$0xff] %v1005
        %1048 = vst [vmem:[%s271 + $0xb0] sm:$0xff] %v1007
        %1049 = vst [vmem:[%s271 + $0xb8] sm:$0xff] %v1009
        %1050 = vst [vmem:[%s271 + $0xc0] sm:$0xff] %v1011
        %1051 = vst [vmem:[%s271 + $0xc8] sm:$0xff] %v1013
        %1052 = vst [vmem:[%s271 + $0xd0] sm:$0xff] %v1015
        %1053 = vst [vmem:[%s271 + $0xd8] sm:$0xff] %v1017
        %1054 = vst [vmem:[%s271 + $0xe0] sm:$0xff] %v1019
        %1055 = vst [vmem:[%s271 + $0xe8] sm:$0xff] %v1021
        %1056 = vst [vmem:[%s271 + $0xf0] sm:$0xff] %v1023
        %1057 = vst [vmem:[%s271 + $0xf8] sm:$0xff] %v1025
        %s1058 = sand.u32 %s141, 1
        %s1059 = scalar_lea.sflag [#allocation4], %s1058
        %s1060 = sand.u32 %s141, 1
        %s1061 = smul.addr %s1060, 256
        %s1062 = scalar_lea.vmem [#allocation8], %s1061
        // Predicated region
        $region53: #{tpu_custom_call.1} parent=39 // pred_check
          %p1063 = pneg %p151
        $region54: #{tpu_custom_call.1} parent=39 // pred_check_branch
          %1065 = sbr.rel (%p1063) target = $region56
        $region55: #{tpu_custom_call.1} parent=39 // pred_region
          %s1066 = smul.u32 32, %s23
          %s1068 = ssub.s32 4096, 4096
          %1069 = vsyncadd %s1059, %s1068
          %s1070 = smul.addr %s1066, 128
          %s1071 = scalar_lea.hbm %s5, %s1070
          %s1072 = sshll.u32 %s1062, 4
          %s1073 = int_to_ptr.vmem [resolvable:$true] %s1072
          %1078 = dma.vmem_to_hbm [thread:$0]  %s1073, 4096, %s1071, %s1059, 128, 128, 8
        $region56: #{tpu_custom_call.1} parent=39 // pred_fallthru
          _
      $region40: #{tpu_custom_call.1} parent=5 // pred_fallthru
        _
      %p1079 = scmp.le.s32.totalorder 2, %s18
      // Predicated region
      $region57: #{tpu_custom_call.1} parent=5 // pred_check
        %p1080 = pneg %p1079
      $region58: #{tpu_custom_call.1} parent=5 // pred_check_branch
        %1082 = sbr.rel (%p1080) target = $region60
      $region59: #{tpu_custom_call.1} parent=5 // pred_region
        %s1083 = ssub.s32 %s18, 2
        // Predicated region
        $region61: #{tpu_custom_call.1} parent=59 // pred_check
          %p1084 = pneg %p157
        $region62: #{tpu_custom_call.1} parent=59 // pred_check_branch
          %1086 = sbr.rel (%p1084) target = $region64
        $region63: #{tpu_custom_call.1} parent=59 // pred_region
          %s1087 = sand.u32 %s142, 1
          %s1088 = scalar_lea.sflag [#allocation4], %s1087
          %s1089 = sand.u32 %s142, 1
          %s1090 = smul.addr %s1089, 256
          %s1091 = scalar_lea.vmem [#allocation8], %s1090
          %1092 = dma.done %s1088, 4096
        $region64: #{tpu_custom_call.1} parent=59 // pred_fallthru
          _
      $region60: #{tpu_custom_call.1} parent=5 // pred_fallthru
        _
    $region6: #{tpu_custom_call.1} parent=1 // loop_footer
      %s22 = sadd.s32 1, %s18
    $region7: #{tpu_custom_call.1} parent=1 // loop_footer_branch
      %17 = sbr.rel target = $region3
    $region8: #{tpu_custom_call.1} parent=1 // loop_exit
      _
    %1093 = vsyncpa [#allocation3], 1
    %s1094 = scalar_lea.sflag [#allocation3], 1
    %1095 = vsyncpa %s1094, 1
    %1096 = vsyncpa [#allocation6], 1
    %1097 = vsyncpa [#allocation4], 1
    %s1098 = scalar_lea.sflag [#allocation4], 1
    %1099 = vsyncpa %s1098, 1

// kernel: tpu_custom_call.1
$region0: #{tpu_custom_call.1}
  #allocation0 [shape = 'u32[]', space=smem, size = 0x4, offset = 0x4, fixed_abs, tag = 'smem constant byte address 0x4 - core index']
  #allocation1 [shape = 'u32[144,128]{1,0:T(1,128)}', space=vmem, size = 0x12000, scoped, tag = 'internal scratch']
  %s0 = inlined_call_operand.hbm [shape: f32[512,128], index: 0, kind: input, shape index: {}]
  %s1 = inlined_call_operand.hbm [shape: f32[128,128], index: 1, kind: input, shape index: {}]
  %s2 = inlined_call_operand.vmem [shape: f32[1,128], index: 2, kind: input, shape index: {}]
  %s3 = inlined_call_operand.hbm [shape: f32[128,128], index: 3, kind: input, shape index: {}]
  %s4 = inlined_call_operand.vmem [shape: f32[1,128], index: 4, kind: input, shape index: {}]
  %s5 = inlined_call_operand.hbm [shape: f32[512,128], index: 5, kind: output, shape index: {}]
  %s6 = sld [smem:[#allocation0]]
  $region65: #{tpu_custom_call.1} parent=0
    _
  %s8 = ssub.s32 1, %s6
  %s9 = scalar_select 0, %s8, %s6
  $region1: #{tpu_custom_call.1} parent=0
    #allocation2 [shape = 'u8[262144]{0}', space=vmem, size = 0x40000, scoped, tag = 'input window, operand 0']
    #allocation3 [shape = 's32[2]{0}', space=sflag, size = 0x8, scoped, tag = 'scoped memory for tpu_custom_call.1']
    #allocation4 [shape = 's32[2]{0}', space=sflag, size = 0x8, scoped, tag = 'scoped memory for tpu_custom_call.1']
    #allocation5 [shape = 'u8[65536]{0}', space=vmem, size = 0x10000, scoped, tag = 'input window, operand 1, single buffered']
    #allocation6 [shape = 's32[1]{0}', space=sflag, size = 0x4, scoped, tag = 'scoped memory for tpu_custom_call.1']
    #allocation7 [shape = 'u8[65536]{0}', space=vmem, size = 0x10000, scoped, tag = 'input window, operand 3, single buffered']
    #allocation8 [shape = 'u8[262144]{0}', space=vmem, size = 0x40000, scoped, tag = 'output window, operand 0']
    %10 = vsyncpa [#allocation3], 0
    %s11 = scalar_lea.sflag [#allocation3], 1
    %12 = vsyncpa %s11, 0
    %13 = vsyncpa [#allocation6], 0
    %14 = vsyncpa [#allocation4], 0
    %s15 = scalar_lea.sflag [#allocation4], 1
    %16 = vsyncpa %s15, 0
    loop: start=0, step=1, limit=4
    $region2: #{tpu_custom_call.1} parent=1 // loop_pre_header
      _
    $region3: #{tpu_custom_call.1} parent=1 // loop_header
      %s18 = sphi 0, %s22
      %p19 = scmp.ge.s32.totalorder %s18, 4
      %s28 = sphi 0, %s30
      %s31 = sphi 0, %s28
      %s32 = sphi 0, %s31
      %s48 = sphi 0, %s32
      %s52 = sphi 0, %s52
      %s54 = sphi 0, %s52
      %s55 = sphi 0, %s54
      %s69 = sphi 0, %s55
      %s73 = sphi 0, %s73
      %s75 = sphi 0, %s73
      %s76 = sphi 0, %s75
      %s90 = sphi 0, %s76
      %s94 = sphi 0, %s94
      %s96 = sphi 0, %s94
      %s97 = sphi 0, %s96
      %s111 = sphi 0, %s97
      %s115 = sphi 0, %s115
      %s117 = sphi 0, %s115
      %s118 = sphi 0, %s117
      %s132 = sphi 0, %s118
      %s138 = sphi 0, %s140
      %s141 = sphi 0, %s138
      %s142 = sphi 0, %s141
      %s158 = sphi 0, %s142
    $region4: #{tpu_custom_call.1} parent=1 // loop_header_branch
      %21 = sbr.rel (%p19) target = $region8
    $region5: #{tpu_custom_call.1} parent=1 // loop_body
      %s23 = ssub.s32 %s18, 1
      %s24 = ssub.s32 %s18, 2
      %s25 = sadd.s32 %s18, 1
      %s26 = ssub.s32 %s18, %s25
      %p27 = scmp.eq.s32.totalorder %s26, 0
      %s29 = sadd.s32 %s28, 1
      %s30 = scalar_select %p27, %s28, %s29
      %p33 = pneg %p27
      %p34 = scmp.eq.s32.totalorder %s18, 1
      %p35 = por %p33, %p34
      %p36 = scmp.ne.s32.totalorder %s28, %s31
      %p37 = scmp.eq.s32.totalorder %s18, 0
      %p38 = por %p36, %p37
      %p39 = scmp.ne.s32.totalorder %s28, %s31
      %p40 = scmp.eq.s32.totalorder %s23, 1
      %p41 = por %p39, %p40
      %p42 = scmp.ne.s32.totalorder %s31, %s32
      %p43 = scmp.eq.s32.totalorder %s23, 0
      %p44 = por %p42, %p43
      %p45 = scmp.ne.s32.totalorder %s31, %s32
      %p46 = scmp.eq.s32.totalorder %s24, 1
      %p47 = por %p45, %p46
      %p49 = scmp.ne.s32.totalorder %s32, %s48
      %p50 = scmp.eq.s32.totalorder %s24, 0
      %p51 = por %p49, %p50
      %s53 = sadd.s32 %s52, 1
      %p56 = scmp.eq.s32.totalorder %s18, 1
      %p57 = scmp.ne.s32.totalorder %s52, %s54
      %p58 = scmp.eq.s32.totalorder %s18, 0
      %p59 = por %p57, %p58
      %p60 = scmp.ne.s32.totalorder %s52, %s54
      %p61 = scmp.eq.s32.totalorder %s23, 1
      %p62 = por %p60, %p61
      %p63 = scmp.ne.s32.totalorder %s54, %s55
      %p64 = scmp.eq.s32.totalorder %s23, 0
      %p65 = por %p63, %p64
      %p66 = scmp.ne.s32.totalorder %s54, %s55
      %p67 = scmp.eq.s32.totalorder %s24, 1
      %p68 = por %p66, %p67
      %p70 = scmp.ne.s32.totalorder %s55, %s69
      %p71 = scmp.eq.s32.totalorder %s24, 0
      %p72 = por %p70, %p71
      %s74 = sadd.s32 %s73, 1
      %p77 = scmp.eq.s32.totalorder %s18, 1
      %p78 = scmp.ne.s32.totalorder %s73, %s75
      %p79 = scmp.eq.s32.totalorder %s18, 0
      %p80 = por %p78, %p79
      %p81 = scmp.ne.s32.totalorder %s73, %s75
      %p82 = scmp.eq.s32.totalorder %s23, 1
      %p83 = por %p81, %p82
      %p84 = scmp.ne.s32.totalorder %s75, %s76
      %p85 = scmp.eq.s32.totalorder %s23, 0
      %p86 = por %p84, %p85
      %p87 = scmp.ne.s32.totalorder %s75, %s76
      %p88 = scmp.eq.s32.totalorder %s24, 1
      %p89 = por %p87, %p88
      %p91 = scmp.ne.s32.totalorder %s76, %s90
      %p92 = scmp.eq.s32.totalorder %s24, 0
      %p93 = por %p91, %p92
      %s95 = sadd.s32 %s94, 1
      %p98 = scmp.eq.s32.totalorder %s18, 1
      %p99 = scmp.ne.s32.totalorder %s94, %s96
      %p100 = scmp.eq.s32.totalorder %s18, 0
      %p101 = por %p99, %p100
      %p102 = scmp.ne.s32.totalorder %s94, %s96
      %p103 = scmp.eq.s32.totalorder %s23, 1
      %p104 = por %p102, %p103
      %p105 = scmp.ne.s32.totalorder %s96, %s97
      %p106 = scmp.eq.s32.totalorder %s23, 0
      %p107 = por %p105, %p106
      %p108 = scmp.ne.s32.totalorder %s96, %s97
      %p109 = scmp.eq.s32.totalorder %s24, 1
      %p110 = por %p108, %p109
      %p112 = scmp.ne.s32.totalorder %s97, %s111
      %p113 = scmp.eq.s32.totalorder %s24, 0
      %p114 = por %p112, %p113
      %s116 = sadd.s32 %s115, 1
      %p119 = scmp.eq.s32.totalorder %s18, 1
      %p120 = scmp.ne.s32.totalorder %s115, %s117
      %p121 = scmp.eq.s32.totalorder %s18, 0
      %p122 = por %p120, %p121
      %p123 = scmp.ne.s32.totalorder %s115, %s117
      %p124 = scmp.eq.s32.totalorder %s23, 1
      %p125 = por %p123, %p124
      %p126 = scmp.ne.s32.totalorder %s117, %s118
      %p127 = scmp.eq.s32.totalorder %s23, 0
      %p128 = por %p126, %p127
      %p129 = scmp.ne.s32.totalorder %s117, %s118
      %p130 = scmp.eq.s32.totalorder %s24, 1
      %p131 = por %p129, %p130
      %p133 = scmp.ne.s32.totalorder %s118, %s132
      %p134 = scmp.eq.s32.totalorder %s24, 0
      %p135 = por %p133, %p134
      %s136 = ssub.s32 %s18, %s25
      %p137 = scmp.eq.s32.totalorder %s136, 0
      %s139 = sadd.s32 %s138, 1
      %s140 = scalar_select %p137, %s138, %s139
      %p143 = pneg %p137
      %p144 = scmp.eq.s32.totalorder %s18, 1
      %p145 = por %p143, %p144
      %p146 = scmp.ne.s32.totalorder %s138, %s141
      %p147 = scmp.eq.s32.totalorder %s18, 0
      %p148 = por %p146, %p147
      %p149 = scmp.ne.s32.totalorder %s138, %s141
      %p150 = scmp.eq.s32.totalorder %s23, 1
      %p151 = por %p149, %p150
      %p152 = scmp.ne.s32.totalorder %s141, %s142
      %p153 = scmp.eq.s32.totalorder %s23, 0
      %p154 = por %p152, %p153
      %p155 = scmp.ne.s32.totalorder %s141, %s142
      %p156 = scmp.eq.s32.totalorder %s24, 1
      %p157 = por %p155, %p156
      %p159 = scmp.ne.s32.totalorder %s142, %s158
      %p160 = scmp.eq.s32.totalorder %s24, 0
      %p161 = por %p159, %p160
      %p162 = scmp.le.s32.totalorder 1, %s18
      %p163 = scmp.lt.s32.totalorder %s18, 3
      %p164 = pnand %p162, %p163
      %p165 = pneg %p164
      // Predicated region
      $region9: #{tpu_custom_call.1} parent=5 // pred_check
        _
      $region10: #{tpu_custom_call.1} parent=5 // pred_check_branch
        %167 = sbr.rel (%p164) target = $region12
      $region11: #{tpu_custom_call.1} parent=5 // pred_region
        %s168 = ssub.s32 %s18, 1
        // Predicated region
        $region13: #{tpu_custom_call.1} parent=11 // pred_check
          %p169 = pneg %p65
        $region14: #{tpu_custom_call.1} parent=11 // pred_check_branch
          %171 = sbr.rel (%p169) target = $region16
        $region15: #{tpu_custom_call.1} parent=11 // pred_region
          %s173 = ssub.s32 2048, 2048
          %174 = vsyncadd [#allocation6], %s173
          %s175 = sshll.u32 [#allocation5], 4
          %s176 = int_to_ptr.vmem [resolvable:$true] %s175
          %181 = dma.hbm_to_vmem [thread:$0]  %s1, 2048, %s176, [#allocation6], 128, 128, 8
        $region16: #{tpu_custom_call.1} parent=11 // pred_fallthru
          _
        // Predicated region
        $region17: #{tpu_custom_call.1} parent=11 // pred_check
          %p182 = pneg %p86
        $region18: #{tpu_custom_call.1} parent=11 // pred_check_branch
          %184 = sbr.rel (%p182) target = $region20
        $region19: #{tpu_custom_call.1} parent=11 // pred_region
          _
        $region20: #{tpu_custom_call.1} parent=11 // pred_fallthru
          _
        // Predicated region
        $region21: #{tpu_custom_call.1} parent=11 // pred_check
          %p185 = pneg %p107
        $region22: #{tpu_custom_call.1} parent=11 // pred_check_branch
          %187 = sbr.rel (%p185) target = $region24
        $region23: #{tpu_custom_call.1} parent=11 // pred_region
          %s189 = ssub.s32 2048, 2048
          %190 = vsyncadd [#allocation6], %s189
          %s191 = sshll.u32 [#allocation7], 4
          %s192 = int_to_ptr.vmem [resolvable:$true] %s191
          %197 = dma.hbm_to_vmem [thread:$0]  %s3, 2048, %s192, [#allocation6], 128, 128, 8
        $region24: #{tpu_custom_call.1} parent=11 // pred_fallthru
          _
        // Predicated region
        $region25: #{tpu_custom_call.1} parent=11 // pred_check
          %p198 = pneg %p128
        $region26: #{tpu_custom_call.1} parent=11 // pred_check_branch
          %200 = sbr.rel (%p198) target = $region28
        $region27: #{tpu_custom_call.1} parent=11 // pred_region
          _
        $region28: #{tpu_custom_call.1} parent=11 // pred_fallthru
          _
      $region12: #{tpu_custom_call.1} parent=5 // pred_fallthru
        _
      %p201 = scmp.lt.s32.totalorder %s18, 2
      // Predicated region
      $region29: #{tpu_custom_call.1} parent=5 // pred_check
        %p202 = pneg %p201
      $region30: #{tpu_custom_call.1} parent=5 // pred_check_branch
        %204 = sbr.rel (%p202) target = $region32
      $region31: #{tpu_custom_call.1} parent=5 // pred_region
        // Predicated region
        $region33: #{tpu_custom_call.1} parent=31 // pred_check
          %p205 = pneg %p38
        $region34: #{tpu_custom_call.1} parent=31 // pred_check_branch
          %207 = sbr.rel (%p205) target = $region36
        $region35: #{tpu_custom_call.1} parent=31 // pred_region
          %s208 = sand.u32 %s28, 1
          %s209 = scalar_lea.sflag [#allocation3], %s208
          %s210 = sand.u32 %s28, 1
          %s211 = smul.addr %s210, 256
          %s212 = scalar_lea.vmem [#allocation2], %s211
          %s213 = smul.u32 32, %s18
          %s215 = ssub.s32 4096, 4096
          %216 = vsyncadd %s209, %s215
          %s217 = smul.addr %s213, 128
          %s218 = scalar_lea.hbm %s0, %s217
          %s219 = sshll.u32 %s212, 4
          %s220 = int_to_ptr.vmem [resolvable:$true] %s219
          %225 = dma.hbm_to_vmem [thread:$0]  %s218, 4096, %s220, %s209, 128, 128, 8
        $region36: #{tpu_custom_call.1} parent=31 // pred_fallthru
          _
      $region32: #{tpu_custom_call.1} parent=5 // pred_fallthru
        _
      %p226 = scmp.le.s32.totalorder 1, %s18
      %p227 = scmp.lt.s32.totalorder %s18, 3
      %p228 = pnand %p226, %p227
      %p229 = pneg %p228
      // Predicated region
      $region37: #{tpu_custom_call.1} parent=5 // pred_check
        _
      $region38: #{tpu_custom_call.1} parent=5 // pred_check_branch
        %231 = sbr.rel (%p228) target = $region40
      $region39: #{tpu_custom_call.1} parent=5 // pred_region
        %s232 = ssub.s32 %s18, 1
        %s233 = sand.u32 %s31, 1
        %s234 = scalar_lea.sflag [#allocation3], %s233
        %s235 = sand.u32 %s31, 1
        %s236 = smul.addr %s235, 256
        %s237 = scalar_lea.vmem [#allocation2], %s236
        // Predicated region
        $region41: #{tpu_custom_call.1} parent=39 // pred_check
          %p238 = pneg %p44
        $region42: #{tpu_custom_call.1} parent=39 // pred_check_branch
          %240 = sbr.rel (%p238) target = $region44
        $region43: #{tpu_custom_call.1} parent=39 // pred_region
          %241 = dma.done %s234, 4096
        $region44: #{tpu_custom_call.1} parent=39 // pred_fallthru
          _
        // Predicated region
        $region45: #{tpu_custom_call.1} parent=39 // pred_check
          %p242 = pneg %p65
        $region46: #{tpu_custom_call.1} parent=39 // pred_check_branch
          %244 = sbr.rel (%p242) target = $region48
        $region47: #{tpu_custom_call.1} parent=39 // pred_region
          %245 = dma.done [#allocation6], 2048
        $region48: #{tpu_custom_call.1} parent=39 // pred_fallthru
          _
        // Predicated region
        $region49: #{tpu_custom_call.1} parent=39 // pred_check
          %p246 = pneg %p107
        $region50: #{tpu_custom_call.1} parent=39 // pred_check_branch
          %248 = sbr.rel (%p246) target = $region52
        $region51: #{tpu_custom_call.1} parent=39 // pred_region
          %249 = dma.done [#allocation6], 2048
        $region52: #{tpu_custom_call.1} parent=39 // pred_fallthru
          _
        %s250 = sand.u32 %s31, 1
        %s251 = scalar_lea.sflag [#allocation3], %s250
        %s252 = sand.u32 %s31, 1
        %s253 = smul.addr %s252, 256
        %s254 = scalar_lea.vmem [#allocation2], %s253
        %p255 = pneg %p44
        %p256 = pneg %p41
        %p257 = pneg %p65
        %p258 = pneg %p62
        %p259 = pneg %p86
        %p260 = pneg %p83
        %p261 = pneg %p107
        %p262 = pneg %p104
        %p263 = pneg %p128
        %p264 = pneg %p125
        %p265 = pneg %p154
        %p266 = pneg %p151
        %s267 = sand.u32 %s141, 1
        %s268 = scalar_lea.sflag [#allocation4], %s267
        %s269 = sand.u32 %s141, 1
        %s270 = smul.addr %s269, 256
        %s271 = scalar_lea.vmem [#allocation8], %s270
        %s272 = smul.u32 32, %s23
        %s273 = smul.u32 32, %s23
        %v274 = vld [vmem:[%s237] sm:$0xff]
        %v275 = vld [vmem:[%s237 + $0x8] sm:$0xff]
        %v276 = vld [vmem:[%s237 + $0x10] sm:$0xff]
        %v277 = vld [vmem:[%s237 + $0x18] sm:$0xff]
        %v278 = vld [vmem:[%s237 + $0x20] sm:$0xff]
        %v279 = vld [vmem:[%s237 + $0x28] sm:$0xff]
        %v280 = vld [vmem:[%s237 + $0x30] sm:$0xff]
        %v281 = vld [vmem:[%s237 + $0x38] sm:$0xff]
        %v282 = vld [vmem:[%s237 + $0x40] sm:$0xff]
        %v283 = vld [vmem:[%s237 + $0x48] sm:$0xff]
        %v284 = vld [vmem:[%s237 + $0x50] sm:$0xff]
        %v285 = vld [vmem:[%s237 + $0x58] sm:$0xff]
        %v286 = vld [vmem:[%s237 + $0x60] sm:$0xff]
        %v287 = vld [vmem:[%s237 + $0x68] sm:$0xff]
        %v288 = vld [vmem:[%s237 + $0x70] sm:$0xff]
        %v289 = vld [vmem:[%s237 + $0x78] sm:$0xff]
        %v290 = vld [vmem:[%s237 + $0x80] sm:$0xff]
        %v291 = vld [vmem:[%s237 + $0x88] sm:$0xff]
        %v292 = vld [vmem:[%s237 + $0x90] sm:$0xff]
        %v293 = vld [vmem:[%s237 + $0x98] sm:$0xff]
        %v294 = vld [vmem:[%s237 + $0xa0] sm:$0xff]
        %v295 = vld [vmem:[%s237 + $0xa8] sm:$0xff]
        %v296 = vld [vmem:[%s237 + $0xb0] sm:$0xff]
        %v297 = vld [vmem:[%s237 + $0xb8] sm:$0xff]
        %v298 = vld [vmem:[%s237 + $0xc0] sm:$0xff]
        %v299 = vld [vmem:[%s237 + $0xc8] sm:$0xff]
        %v300 = vld [vmem:[%s237 + $0xd0] sm:$0xff]
        %v301 = vld [vmem:[%s237 + $0xd8] sm:$0xff]
        %v302 = vld [vmem:[%s237 + $0xe0] sm:$0xff]
        %v303 = vld [vmem:[%s237 + $0xe8] sm:$0xff]
        %v304 = vld [vmem:[%s237 + $0xf0] sm:$0xff]
        %v305 = vld [vmem:[%s237 + $0xf8] sm:$0xff]
        %v306 = vld [vmem:[#allocation5] sm:$0xff]
        %v307 = vld [vmem:[#allocation5 + $0x8] sm:$0xff]
        %v308 = vld [vmem:[#allocation5 + $0x10] sm:$0xff]
        %v309 = vld [vmem:[#allocation5 + $0x18] sm:$0xff]
        %v310 = vld [vmem:[#allocation5 + $0x20] sm:$0xff]
        %v311 = vld [vmem:[#allocation5 + $0x28] sm:$0xff]
        %v312 = vld [vmem:[#allocation5 + $0x30] sm:$0xff]
        %v313 = vld [vmem:[#allocation5 + $0x38] sm:$0xff]
        %v314 = vld [vmem:[#allocation5 + $0x40] sm:$0xff]
        %v315 = vld [vmem:[#allocation5 + $0x48] sm:$0xff]
        %v316 = vld [vmem:[#allocation5 + $0x50] sm:$0xff]
        %v317 = vld [vmem:[#allocation5 + $0x58] sm:$0xff]
        %v318 = vld [vmem:[#allocation5 + $0x60] sm:$0xff]
        %v319 = vld [vmem:[#allocation5 + $0x68] sm:$0xff]
        %v320 = vld [vmem:[#allocation5 + $0x70] sm:$0xff]
        %v321 = vld [vmem:[#allocation5 + $0x78] sm:$0xff]
        %v322 = vld [vmem:[%s2] sm:$0x1]
        %v324 = vlaneseq
        %v325 = vshrl.u32 %v324, 7
        %v326 = vsub.s32 0, %v325
        %v327 = vrot.slane %v322, %v326
        %329 = vmatprep.subr.mxu0 0.0
        %330 = vmatpush1.msra.mxu0 %v321
        %331 = vmatprep.subr.mxu0 0.0
        %332 = vmatpush1.msra.mxu0 %v320
        %333 = vmatprep.subr.mxu0 0.0
        %334 = vmatpush1.msra.mxu0 %v319
        %335 = vmatprep.subr.mxu0 0.0
        %336 = vmatpush1.msra.mxu0 %v318
        %337 = vmatprep.subr.mxu0 0.0
        %338 = vmatpush1.msra.mxu0 %v317
        %339 = vmatprep.subr.mxu0 0.0
        %340 = vmatpush1.msra.mxu0 %v316
        %341 = vmatprep.subr.mxu0 0.0
        %342 = vmatpush1.msra.mxu0 %v315
        %343 = vmatprep.subr.mxu0 0.0
        %344 = vmatpush1.msra.mxu0 %v314
        %345 = vmatprep.subr.mxu0 0.0
        %346 = vmatpush1.msra.mxu0 %v313
        %347 = vmatprep.subr.mxu0 0.0
        %348 = vmatpush1.msra.mxu0 %v312
        %349 = vmatprep.subr.mxu0 0.0
        %350 = vmatpush1.msra.mxu0 %v311
        %351 = vmatprep.subr.mxu0 0.0
        %352 = vmatpush1.msra.mxu0 %v310
        %353 = vmatprep.subr.mxu0 0.0
        %354 = vmatpush1.msra.mxu0 %v309
        %355 = vmatprep.subr.mxu0 0.0
        %356 = vmatpush1.msra.mxu0 %v308
        %357 = vmatprep.subr.mxu0 0.0
        %358 = vmatpush1.msra.mxu0 %v307
        %359 = vmatprep.subr.mxu0 0.0
        %360 = vmatpush1.msra.mxu0 %v306
        %361 = vmatprep.subr.mxu0 0.0
        %362 = vmatpush2.msra.mxu0 0.0
        %363 = vmatprep.subr.mxu0 0.0
        %364 = vmatpush2.msra.mxu0 0.0
        %365 = vmatprep.subr.mxu0 0.0
        %366 = vmatpush2.msra.mxu0 0.0
        %367 = vmatprep.subr.mxu0 0.0
        %368 = vmatpush2.msra.mxu0 0.0
        %369 = vmatprep.subr.mxu0 0.0
        %370 = vmatpush2.msra.mxu0 0.0
        %371 = vmatprep.subr.mxu0 0.0
        %372 = vmatpush2.msra.mxu0 0.0
        %373 = vmatprep.subr.mxu0 0.0
        %374 = vmatpush2.msra.mxu0 0.0
        %375 = vmatprep.subr.mxu0 0.0
        %376 = vmatpush2.msra.mxu0 0.0
        %377 = vmatprep.subr.mxu0 0.0
        %378 = vmatpush2.msra.mxu0 0.0
        %379 = vmatprep.subr.mxu0 0.0
        %380 = vmatpush2.msra.mxu0 0.0
        %381 = vmatprep.subr.mxu0 0.0
        %382 = vmatpush2.msra.mxu0 0.0
        %383 = vmatprep.subr.mxu0 0.0
        %384 = vmatpush2.msra.mxu0 0.0
        %385 = vmatprep.subr.mxu0 0.0
        %386 = vmatpush2.msra.mxu0 0.0
        %387 = vmatprep.subr.mxu0 0.0
        %388 = vmatpush2.msra.mxu0 0.0
        %389 = vmatprep.subr.mxu0 0.0
        %390 = vmatpush2.msra.mxu0 0.0
        %391 = vmatprep.subr.mxu0 0.0
        %392 = vmatpush2.msra.mxu0 0.0
        %393 = vmatprep.mubr.f32.mxu0 0.0
        %394 = vmatmul.mubr.f32.gmra.mxu0 %v274
        %v395 = vpop.f32.mrf.mxu0
        %v396 = vadd.f32 %v327, %v395
        %v397 = vpop.f32.mrf.mxu0
        %398 = vmatprep.mubr.f32.mxu0 0.0
        %399 = vmatmul.mubr.f32.gmra.mxu0 %v275
        %v400 = vpop.f32.mrf.mxu0
        %v401 = vadd.f32 %v327, %v400
        %v402 = vpop.f32.mrf.mxu0
        %403 = vmatprep.mubr.f32.mxu0 0.0
        %404 = vmatmul.mubr.f32.gmra.mxu0 %v276
        %v405 = vpop.f32.mrf.mxu0
        %v406 = vadd.f32 %v327, %v405
        %v407 = vpop.f32.mrf.mxu0
        %408 = vmatprep.mubr.f32.mxu0 0.0
        %409 = vmatmul.mubr.f32.gmra.mxu0 %v277
        %v410 = vpop.f32.mrf.mxu0
        %v411 = vadd.f32 %v327, %v410
        %v412 = vpop.f32.mrf.mxu0
        %413 = vmatprep.mubr.f32.mxu0 0.0
        %414 = vmatmul.mubr.f32.gmra.mxu0 %v278
        %v415 = vpop.f32.mrf.mxu0
        %v416 = vadd.f32 %v327, %v415
        %v417 = vpop.f32.mrf.mxu0
        %418 = vmatprep.mubr.f32.mxu0 0.0
        %419 = vmatmul.mubr.f32.gmra.mxu0 %v279
        %v420 = vpop.f32.mrf.mxu0
        %v421 = vadd.f32 %v327, %v420
        %v422 = vpop.f32.mrf.mxu0
        %423 = vmatprep.mubr.f32.mxu0 0.0
        %424 = vmatmul.mubr.f32.gmra.mxu0 %v280
        %v425 = vpop.f32.mrf.mxu0
        %v426 = vadd.f32 %v327, %v425
        %v427 = vpop.f32.mrf.mxu0
        %428 = vmatprep.mubr.f32.mxu0 0.0
        %429 = vmatmul.mubr.f32.gmra.mxu0 %v281
        %v430 = vpop.f32.mrf.mxu0
        %v431 = vadd.f32 %v327, %v430
        %v432 = vpop.f32.mrf.mxu0
        %433 = vmatprep.mubr.f32.mxu0 0.0
        %434 = vmatmul.mubr.f32.gmra.mxu0 %v282
        %v435 = vpop.f32.mrf.mxu0
        %v436 = vadd.f32 %v327, %v435
        %v437 = vpop.f32.mrf.mxu0
        %438 = vmatprep.mubr.f32.mxu0 0.0
        %439 = vmatmul.mubr.f32.gmra.mxu0 %v283
        %v440 = vpop.f32.mrf.mxu0
        %v441 = vadd.f32 %v327, %v440
        %v442 = vpop.f32.mrf.mxu0
        %443 = vmatprep.mubr.f32.mxu0 0.0
        %444 = vmatmul.mubr.f32.gmra.mxu0 %v284
        %v445 = vpop.f32.mrf.mxu0
        %v446 = vadd.f32 %v327, %v445
        %v447 = vpop.f32.mrf.mxu0
        %448 = vmatprep.mubr.f32.mxu0 0.0
        %449 = vmatmul.mubr.f32.gmra.mxu0 %v285
        %v450 = vpop.f32.mrf.mxu0
        %v451 = vadd.f32 %v327, %v450
        %v452 = vpop.f32.mrf.mxu0
        %453 = vmatprep.mubr.f32.mxu0 0.0
        %454 = vmatmul.mubr.f32.gmra.mxu0 %v286
        %v455 = vpop.f32.mrf.mxu0
        %v456 = vadd.f32 %v327, %v455
        %v457 = vpop.f32.mrf.mxu0
        %458 = vmatprep.mubr.f32.mxu0 0.0
        %459 = vmatmul.mubr.f32.gmra.mxu0 %v287
        %v460 = vpop.f32.mrf.mxu0
        %v461 = vadd.f32 %v327, %v460
        %v462 = vpop.f32.mrf.mxu0
        %463 = vmatprep.mubr.f32.mxu0 0.0
        %464 = vmatmul.mubr.f32.gmra.mxu0 %v288
        %v465 = vpop.f32.mrf.mxu0
        %v466 = vadd.f32 %v327, %v465
        %v467 = vpop.f32.mrf.mxu0
        %468 = vmatprep.mubr.f32.mxu0 0.0
        %469 = vmatmul.mubr.f32.gmra.mxu0 %v289
        %v470 = vpop.f32.mrf.mxu0
        %v471 = vadd.f32 %v327, %v470
        %v472 = vpop.f32.mrf.mxu0
        %473 = vmatprep.mubr.f32.mxu0 0.0
        %474 = vmatmul.mubr.f32.gmra.mxu0 %v290
        %v475 = vpop.f32.mrf.mxu0
        %v476 = vadd.f32 %v327, %v475
        %v477 = vpop.f32.mrf.mxu0
        %478 = vmatprep.mubr.f32.mxu0 0.0
        %479 = vmatmul.mubr.f32.gmra.mxu0 %v291
        %v480 = vpop.f32.mrf.mxu0
        %v481 = vadd.f32 %v327, %v480
        %v482 = vpop.f32.mrf.mxu0
        %483 = vmatprep.mubr.f32.mxu0 0.0
        %484 = vmatmul.mubr.f32.gmra.mxu0 %v292
        %v485 = vpop.f32.mrf.mxu0
        %v486 = vadd.f32 %v327, %v485
        %v487 = vpop.f32.mrf.mxu0
        %488 = vmatprep.mubr.f32.mxu0 0.0
        %489 = vmatmul.mubr.f32.gmra.mxu0 %v293
        %v490 = vpop.f32.mrf.mxu0
        %v491 = vadd.f32 %v327, %v490
        %v492 = vpop.f32.mrf.mxu0
        %493 = vmatprep.mubr.f32.mxu0 0.0
        %494 = vmatmul.mubr.f32.gmra.mxu0 %v294
        %v495 = vpop.f32.mrf.mxu0
        %v496 = vadd.f32 %v327, %v495
        %v497 = vpop.f32.mrf.mxu0
        %498 = vmatprep.mubr.f32.mxu0 0.0
        %499 = vmatmul.mubr.f32.gmra.mxu0 %v295
        %v500 = vpop.f32.mrf.mxu0
        %v501 = vadd.f32 %v327, %v500
        %v502 = vpop.f32.mrf.mxu0
        %503 = vmatprep.mubr.f32.mxu0 0.0
        %504 = vmatmul.mubr.f32.gmra.mxu0 %v296
        %v505 = vpop.f32.mrf.mxu0
        %v506 = vadd.f32 %v327, %v505
        %v507 = vpop.f32.mrf.mxu0
        %508 = vmatprep.mubr.f32.mxu0 0.0
        %509 = vmatmul.mubr.f32.gmra.mxu0 %v297
        %v510 = vpop.f32.mrf.mxu0
        %v511 = vadd.f32 %v327, %v510
        %v512 = vpop.f32.mrf.mxu0
        %513 = vmatprep.mubr.f32.mxu0 0.0
        %514 = vmatmul.mubr.f32.gmra.mxu0 %v298
        %v515 = vpop.f32.mrf.mxu0
        %v516 = vadd.f32 %v327, %v515
        %v517 = vpop.f32.mrf.mxu0
        %518 = vmatprep.mubr.f32.mxu0 0.0
        %519 = vmatmul.mubr.f32.gmra.mxu0 %v299
        %v520 = vpop.f32.mrf.mxu0
        %v521 = vadd.f32 %v327, %v520
        %v522 = vpop.f32.mrf.mxu0
        %523 = vmatprep.mubr.f32.mxu0 0.0
        %524 = vmatmul.mubr.f32.gmra.mxu0 %v300
        %v525 = vpop.f32.mrf.mxu0
        %v526 = vadd.f32 %v327, %v525
        %v527 = vpop.f32.mrf.mxu0
        %528 = vmatprep.mubr.f32.mxu0 0.0
        %529 = vmatmul.mubr.f32.gmra.mxu0 %v301
        %v530 = vpop.f32.mrf.mxu0
        %v531 = vadd.f32 %v327, %v530
        %v532 = vpop.f32.mrf.mxu0
        %533 = vmatprep.mubr.f32.mxu0 0.0
        %534 = vmatmul.mubr.f32.gmra.mxu0 %v302
        %v535 = vpop.f32.mrf.mxu0
        %v536 = vadd.f32 %v327, %v535
        %v537 = vpop.f32.mrf.mxu0
        %538 = vmatprep.mubr.f32.mxu0 0.0
        %539 = vmatmul.mubr.f32.gmra.mxu0 %v303
        %v540 = vpop.f32.mrf.mxu0
        %v541 = vadd.f32 %v327, %v540
        %v542 = vpop.f32.mrf.mxu0
        %543 = vmatprep.mubr.f32.mxu0 0.0
        %544 = vmatmul.mubr.f32.gmra.mxu0 %v304
        %v545 = vpop.f32.mrf.mxu0
        %v546 = vadd.f32 %v327, %v545
        %v547 = vpop.f32.mrf.mxu0
        %548 = vmatprep.mubr.f32.mxu0 0.0
        %549 = vmatmul.mubr.f32.gmra.mxu0 %v305
        %v550 = vpop.f32.mrf.mxu0
        %v551 = vadd.f32 %v327, %v550
        %v552 = vpop.f32.mrf.mxu0
        %553 = vdwg.mxu0
        %v554 = vmax.f32 %v396, 0.0
        %v555 = vmax.f32 %v401, 0.0
        %v556 = vmax.f32 %v406, 0.0
        %v557 = vmax.f32 %v411, 0.0
        %v558 = vmax.f32 %v416, 0.0
        %v559 = vmax.f32 %v421, 0.0
        %v560 = vmax.f32 %v426, 0.0
        %v561 = vmax.f32 %v431, 0.0
        %v562 = vmax.f32 %v436, 0.0
        %v563 = vmax.f32 %v441, 0.0
        %v564 = vmax.f32 %v446, 0.0
        %v565 = vmax.f32 %v451, 0.0
        %v566 = vmax.f32 %v456, 0.0
        %v567 = vmax.f32 %v461, 0.0
        %v568 = vmax.f32 %v466, 0.0
        %v569 = vmax.f32 %v471, 0.0
        %v570 = vmax.f32 %v476, 0.0
        %v571 = vmax.f32 %v481, 0.0
        %v572 = vmax.f32 %v486, 0.0
        %v573 = vmax.f32 %v491, 0.0
        %v574 = vmax.f32 %v496, 0.0
        %v575 = vmax.f32 %v501, 0.0
        %v576 = vmax.f32 %v506, 0.0
        %v577 = vmax.f32 %v511, 0.0
        %v578 = vmax.f32 %v516, 0.0
        %v579 = vmax.f32 %v521, 0.0
        %v580 = vmax.f32 %v526, 0.0
        %v581 = vmax.f32 %v531, 0.0
        %v582 = vmax.f32 %v536, 0.0
        %v583 = vmax.f32 %v541, 0.0
        %v584 = vmax.f32 %v546, 0.0
        %v585 = vmax.f32 %v551, 0.0
        %v586 = vld [vmem:[#allocation7] sm:$0xff]
        %v587 = vld [vmem:[#allocation7 + $0x8] sm:$0xff]
        %v588 = vld [vmem:[#allocation7 + $0x10] sm:$0xff]
        %v589 = vld [vmem:[#allocation7 + $0x18] sm:$0xff]
        %v590 = vld [vmem:[#allocation7 + $0x20] sm:$0xff]
        %v591 = vld [vmem:[#allocation7 + $0x28] sm:$0xff]
        %v592 = vld [vmem:[#allocation7 + $0x30] sm:$0xff]
        %v593 = vld [vmem:[#allocation7 + $0x38] sm:$0xff]
        %v594 = vld [vmem:[#allocation7 + $0x40] sm:$0xff]
        %v595 = vld [vmem:[#allocation7 + $0x48] sm:$0xff]
        %v596 = vld [vmem:[#allocation7 + $0x50] sm:$0xff]
        %v597 = vld [vmem:[#allocation7 + $0x58] sm:$0xff]
        %v598 = vld [vmem:[#allocation7 + $0x60] sm:$0xff]
        %v599 = vld [vmem:[#allocation7 + $0x68] sm:$0xff]
        %v600 = vld [vmem:[#allocation7 + $0x70] sm:$0xff]
        %v601 = vld [vmem:[#allocation7 + $0x78] sm:$0xff]
        %v602 = vld [vmem:[%s4] sm:$0x1]
        %v604 = vlaneseq
        %v605 = vshrl.u32 %v604, 7
        %v606 = vsub.s32 0, %v605
        %v607 = vrot.slane %v602, %v606
        %609 = vmatprep.subr.mxu0 0.0
        %610 = vmatpush1.msra.mxu0 %v601
        %611 = vmatprep.subr.mxu0 0.0
        %612 = vmatpush1.msra.mxu0 %v600
        %613 = vmatprep.subr.mxu0 0.0
        %614 = vmatpush1.msra.mxu0 %v599
        %615 = vmatprep.subr.mxu0 0.0
        %616 = vmatpush1.msra.mxu0 %v598
        %617 = vmatprep.subr.mxu0 0.0
        %618 = vmatpush1.msra.mxu0 %v597
        %619 = vmatprep.subr.mxu0 0.0
        %620 = vmatpush1.msra.mxu0 %v596
        %621 = vmatprep.subr.mxu0 0.0
        %622 = vmatpush1.msra.mxu0 %v595
        %623 = vmatprep.subr.mxu0 0.0
        %624 = vmatpush1.msra.mxu0 %v594
        %625 = vmatprep.subr.mxu0 0.0
        %626 = vmatpush1.msra.mxu0 %v593
        %627 = vmatprep.subr.mxu0 0.0
        %628 = vmatpush1.msra.mxu0 %v592
        %629 = vmatprep.subr.mxu0 0.0
        %630 = vmatpush1.msra.mxu0 %v591
        %631 = vmatprep.subr.mxu0 0.0
        %632 = vmatpush1.msra.mxu0 %v590
        %633 = vmatprep.subr.mxu0 0.0
        %634 = vmatpush1.msra.mxu0 %v589
        %635 = vmatprep.subr.mxu0 0.0
        %636 = vmatpush1.msra.mxu0 %v588
        %637 = vmatprep.subr.mxu0 0.0
        %638 = vmatpush1.msra.mxu0 %v587
        %639 = vmatprep.subr.mxu0 0.0
        %640 = vmatpush1.msra.mxu0 %v586
        %641 = vmatprep.subr.mxu0 0.0
        %642 = vmatpush2.msra.mxu0 0.0
        %643 = vmatprep.subr.mxu0 0.0
        %644 = vmatpush2.msra.mxu0 0.0
        %645 = vmatprep.subr.mxu0 0.0
        %646 = vmatpush2.msra.mxu0 0.0
        %647 = vmatprep.subr.mxu0 0.0
        %648 = vmatpush2.msra.mxu0 0.0
        %649 = vmatprep.subr.mxu0 0.0
        %650 = vmatpush2.msra.mxu0 0.0
        %651 = vmatprep.subr.mxu0 0.0
        %652 = vmatpush2.msra.mxu0 0.0
        %653 = vmatprep.subr.mxu0 0.0
        %654 = vmatpush2.msra.mxu0 0.0
        %655 = vmatprep.subr.mxu0 0.0
        %656 = vmatpush2.msra.mxu0 0.0
        %657 = vmatprep.subr.mxu0 0.0
        %658 = vmatpush2.msra.mxu0 0.0
        %659 = vmatprep.subr.mxu0 0.0
        %660 = vmatpush2.msra.mxu0 0.0
        %661 = vmatprep.subr.mxu0 0.0
        %662 = vmatpush2.msra.mxu0 0.0
        %663 = vmatprep.subr.mxu0 0.0
        %664 = vmatpush2.msra.mxu0 0.0
        %665 = vmatprep.subr.mxu0 0.0
        %666 = vmatpush2.msra.mxu0 0.0
        %667 = vmatprep.subr.mxu0 0.0
        %668 = vmatpush2.msra.mxu0 0.0
        %669 = vmatprep.subr.mxu0 0.0
        %670 = vmatpush2.msra.mxu0 0.0
        %671 = vmatprep.subr.mxu0 0.0
        %672 = vmatpush2.msra.mxu0 0.0
        %673 = vmatprep.mubr.f32.mxu0 0.0
        %674 = vmatmul.mubr.f32.gmra.mxu0 %v554
        %v675 = vpop.f32.mrf.mxu0
        %v676 = vadd.f32 %v607, %v675
        %v677 = vpop.f32.mrf.mxu0
        %678 = vmatprep.mubr.f32.mxu0 0.0
        %679 = vmatmul.mubr.f32.gmra.mxu0 %v555
        %v680 = vpop.f32.mrf.mxu0
        %v681 = vadd.f32 %v607, %v680
        %v682 = vpop.f32.mrf.mxu0
        %683 = vmatprep.mubr.f32.mxu0 0.0
        %684 = vmatmul.mubr.f32.gmra.mxu0 %v556
        %v685 = vpop.f32.mrf.mxu0
        %v686 = vadd.f32 %v607, %v685
        %v687 = vpop.f32.mrf.mxu0
        %688 = vmatprep.mubr.f32.mxu0 0.0
        %689 = vmatmul.mubr.f32.gmra.mxu0 %v557
        %v690 = vpop.f32.mrf.mxu0
        %v691 = vadd.f32 %v607, %v690
        %v692 = vpop.f32.mrf.mxu0
        %693 = vmatprep.mubr.f32.mxu0 0.0
        %694 = vmatmul.mubr.f32.gmra.mxu0 %v558
        %v695 = vpop.f32.mrf.mxu0
        %v696 = vadd.f32 %v607, %v695
        %v697 = vpop.f32.mrf.mxu0
        %698 = vmatprep.mubr.f32.mxu0 0.0
        %699 = vmatmul.mubr.f32.gmra.mxu0 %v559
        %v700 = vpop.f32.mrf.mxu0
        %v701 = vadd.f32 %v607, %v700
        %v702 = vpop.f32.mrf.mxu0
        %703 = vmatprep.mubr.f32.mxu0 0.0
        %704 = vmatmul.mubr.f32.gmra.mxu0 %v560
        %v705 = vpop.f32.mrf.mxu0
        %v706 = vadd.f32 %v607, %v705
        %v707 = vpop.f32.mrf.mxu0
        %708 = vmatprep.mubr.f32.mxu0 0.0
        %709 = vmatmul.mubr.f32.gmra.mxu0 %v561
        %v710 = vpop.f32.mrf.mxu0
        %v711 = vadd.f32 %v607, %v710
        %v712 = vpop.f32.mrf.mxu0
        %713 = vmatprep.mubr.f32.mxu0 0.0
        %714 = vmatmul.mubr.f32.gmra.mxu0 %v562
        %v715 = vpop.f32.mrf.mxu0
        %v716 = vadd.f32 %v607, %v715
        %v717 = vpop.f32.mrf.mxu0
        %718 = vmatprep.mubr.f32.mxu0 0.0
        %719 = vmatmul.mubr.f32.gmra.mxu0 %v563
        %v720 = vpop.f32.mrf.mxu0
        %v721 = vadd.f32 %v607, %v720
        %v722 = vpop.f32.mrf.mxu0
        %723 = vmatprep.mubr.f32.mxu0 0.0
        %724 = vmatmul.mubr.f32.gmra.mxu0 %v564
        %v725 = vpop.f32.mrf.mxu0
        %v726 = vadd.f32 %v607, %v725
        %v727 = vpop.f32.mrf.mxu0
        %728 = vmatprep.mubr.f32.mxu0 0.0
        %729 = vmatmul.mubr.f32.gmra.mxu0 %v565
        %v730 = vpop.f32.mrf.mxu0
        %v731 = vadd.f32 %v607, %v730
        %v732 = vpop.f32.mrf.mxu0
        %733 = vmatprep.mubr.f32.mxu0 0.0
        %734 = vmatmul.mubr.f32.gmra.mxu0 %v566
        %v735 = vpop.f32.mrf.mxu0
        %v736 = vadd.f32 %v607, %v735
        %v737 = vpop.f32.mrf.mxu0
        %738 = vmatprep.mubr.f32.mxu0 0.0
        %739 = vmatmul.mubr.f32.gmra.mxu0 %v567
        %v740 = vpop.f32.mrf.mxu0
        %v741 = vadd.f32 %v607, %v740
        %v742 = vpop.f32.mrf.mxu0
        %743 = vmatprep.mubr.f32.mxu0 0.0
        %744 = vmatmul.mubr.f32.gmra.mxu0 %v568
        %v745 = vpop.f32.mrf.mxu0
        %v746 = vadd.f32 %v607, %v745
        %v747 = vpop.f32.mrf.mxu0
        %748 = vmatprep.mubr.f32.mxu0 0.0
        %749 = vmatmul.mubr.f32.gmra.mxu0 %v569
        %v750 = vpop.f32.mrf.mxu0
        %v751 = vadd.f32 %v607, %v750
        %v752 = vpop.f32.mrf.mxu0
        %753 = vmatprep.mubr.f32.mxu0 0.0
        %754 = vmatmul.mubr.f32.gmra.mxu0 %v570
        %v755 = vpop.f32.mrf.mxu0
        %v756 = vadd.f32 %v607, %v755
        %v757 = vpop.f32.mrf.mxu0
        %758 = vmatprep.mubr.f32.mxu0 0.0
        %759 = vmatmul.mubr.f32.gmra.mxu0 %v571
        %v760 = vpop.f32.mrf.mxu0
        %v761 = vadd.f32 %v607, %v760
        %v762 = vpop.f32.mrf.mxu0
        %763 = vmatprep.mubr.f32.mxu0 0.0
        %764 = vmatmul.mubr.f32.gmra.mxu0 %v572
        %v765 = vpop.f32.mrf.mxu0
        %v766 = vadd.f32 %v607, %v765
        %v767 = vpop.f32.mrf.mxu0
        %768 = vmatprep.mubr.f32.mxu0 0.0
        %769 = vmatmul.mubr.f32.gmra.mxu0 %v573
        %v770 = vpop.f32.mrf.mxu0
        %v771 = vadd.f32 %v607, %v770
        %v772 = vpop.f32.mrf.mxu0
        %773 = vmatprep.mubr.f32.mxu0 0.0
        %774 = vmatmul.mubr.f32.gmra.mxu0 %v574
        %v775 = vpop.f32.mrf.mxu0
        %v776 = vadd.f32 %v607, %v775
        %v777 = vpop.f32.mrf.mxu0
        %778 = vmatprep.mubr.f32.mxu0 0.0
        %779 = vmatmul.mubr.f32.gmra.mxu0 %v575
        %v780 = vpop.f32.mrf.mxu0
        %v781 = vadd.f32 %v607, %v780
        %v782 = vpop.f32.mrf.mxu0
        %783 = vmatprep.mubr.f32.mxu0 0.0
        %784 = vmatmul.mubr.f32.gmra.mxu0 %v576
        %v785 = vpop.f32.mrf.mxu0
        %v786 = vadd.f32 %v607, %v785
        %v787 = vpop.f32.mrf.mxu0
        %788 = vmatprep.mubr.f32.mxu0 0.0
        %789 = vmatmul.mubr.f32.gmra.mxu0 %v577
        %v790 = vpop.f32.mrf.mxu0
        %v791 = vadd.f32 %v607, %v790
        %v792 = vpop.f32.mrf.mxu0
        %793 = vmatprep.mubr.f32.mxu0 0.0
        %794 = vmatmul.mubr.f32.gmra.mxu0 %v578
        %v795 = vpop.f32.mrf.mxu0
        %v796 = vadd.f32 %v607, %v795
        %v797 = vpop.f32.mrf.mxu0
        %798 = vmatprep.mubr.f32.mxu0 0.0
        %799 = vmatmul.mubr.f32.gmra.mxu0 %v579
        %v800 = vpop.f32.mrf.mxu0
        %v801 = vadd.f32 %v607, %v800
        %v802 = vpop.f32.mrf.mxu0
        %803 = vmatprep.mubr.f32.mxu0 0.0
        %804 = vmatmul.mubr.f32.gmra.mxu0 %v580
        %v805 = vpop.f32.mrf.mxu0
        %v806 = vadd.f32 %v607, %v805
        %v807 = vpop.f32.mrf.mxu0
        %808 = vmatprep.mubr.f32.mxu0 0.0
        %809 = vmatmul.mubr.f32.gmra.mxu0 %v581
        %v810 = vpop.f32.mrf.mxu0
        %v811 = vadd.f32 %v607, %v810
        %v812 = vpop.f32.mrf.mxu0
        %813 = vmatprep.mubr.f32.mxu0 0.0
        %814 = vmatmul.mubr.f32.gmra.mxu0 %v582
        %v815 = vpop.f32.mrf.mxu0
        %v816 = vadd.f32 %v607, %v815
        %v817 = vpop.f32.mrf.mxu0
        %818 = vmatprep.mubr.f32.mxu0 0.0
        %819 = vmatmul.mubr.f32.gmra.mxu0 %v583
        %v820 = vpop.f32.mrf.mxu0
        %v821 = vadd.f32 %v607, %v820
        %v822 = vpop.f32.mrf.mxu0
        %823 = vmatprep.mubr.f32.mxu0 0.0
        %824 = vmatmul.mubr.f32.gmra.mxu0 %v584
        %v825 = vpop.f32.mrf.mxu0
        %v826 = vadd.f32 %v607, %v825
        %v827 = vpop.f32.mrf.mxu0
        %828 = vmatprep.mubr.f32.mxu0 0.0
        %829 = vmatmul.mubr.f32.gmra.mxu0 %v585
        %v830 = vpop.f32.mrf.mxu0
        %v831 = vadd.f32 %v607, %v830
        %v832 = vpop.f32.mrf.mxu0
        %833 = vdwg.mxu0
        %v834 = vxor.u32 %v676, 2147483648
        %v835 = vxor.u32 %v681, 2147483648
        %v836 = vxor.u32 %v686, 2147483648
        %v837 = vxor.u32 %v691, 2147483648
        %v838 = vxor.u32 %v696, 2147483648
        %v839 = vxor.u32 %v701, 2147483648
        %v840 = vxor.u32 %v706, 2147483648
        %v841 = vxor.u32 %v711, 2147483648
        %v842 = vxor.u32 %v716, 2147483648
        %v843 = vxor.u32 %v721, 2147483648
        %v844 = vxor.u32 %v726, 2147483648
        %v845 = vxor.u32 %v731, 2147483648
        %v846 = vxor.u32 %v736, 2147483648
        %v847 = vxor.u32 %v741, 2147483648
        %v848 = vxor.u32 %v746, 2147483648
        %v849 = vxor.u32 %v751, 2147483648
        %v850 = vxor.u32 %v756, 2147483648
        %v851 = vxor.u32 %v761, 2147483648
        %v852 = vxor.u32 %v766, 2147483648
        %v853 = vxor.u32 %v771, 2147483648
        %v854 = vxor.u32 %v776, 2147483648
        %v855 = vxor.u32 %v781, 2147483648
        %v856 = vxor.u32 %v786, 2147483648
        %v857 = vxor.u32 %v791, 2147483648
        %v858 = vxor.u32 %v796, 2147483648
        %v859 = vxor.u32 %v801, 2147483648
        %v860 = vxor.u32 %v806, 2147483648
        %v861 = vxor.u32 %v811, 2147483648
        %v862 = vxor.u32 %v816, 2147483648
        %v863 = vxor.u32 %v821, 2147483648
        %v864 = vxor.u32 %v826, 2147483648
        %v865 = vxor.u32 %v831, 2147483648
        %v866 = vmul.f32 %v834, 1.442695
        %v867 = vpow.pop %v866
        %v868 = vmul.f32 %v835, 1.442695
        %v869 = vpow.pop %v868
        %v870 = vmul.f32 %v836, 1.442695
        %v871 = vpow.pop %v870
        %v872 = vmul.f32 %v837, 1.442695
        %v873 = vpow.pop %v872
        %v874 = vmul.f32 %v838, 1.442695
        %v875 = vpow.pop %v874
        %v876 = vmul.f32 %v839, 1.442695
        %v877 = vpow.pop %v876
        %v878 = vmul.f32 %v840, 1.442695
        %v879 = vpow.pop %v878
        %v880 = vmul.f32 %v841, 1.442695
        %v881 = vpow.pop %v880
        %v882 = vmul.f32 %v842, 1.442695
        %v883 = vpow.pop %v882
        %v884 = vmul.f32 %v843, 1.442695
        %v885 = vpow.pop %v884
        %v886 = vmul.f32 %v844, 1.442695
        %v887 = vpow.pop %v886
        %v888 = vmul.f32 %v845, 1.442695
        %v889 = vpow.pop %v888
        %v890 = vmul.f32 %v846, 1.442695
        %v891 = vpow.pop %v890
        %v892 = vmul.f32 %v847, 1.442695
        %v893 = vpow.pop %v892
        %v894 = vmul.f32 %v848, 1.442695
        %v895 = vpow.pop %v894
        %v896 = vmul.f32 %v849, 1.442695
        %v897 = vpow.pop %v896
        %v898 = vmul.f32 %v850, 1.442695
        %v899 = vpow.pop %v898
        %v900 = vmul.f32 %v851, 1.442695
        %v901 = vpow.pop %v900
        %v902 = vmul.f32 %v852, 1.442695
        %v903 = vpow.pop %v902
        %v904 = vmul.f32 %v853, 1.442695
        %v905 = vpow.pop %v904
        %v906 = vmul.f32 %v854, 1.442695
        %v907 = vpow.pop %v906
        %v908 = vmul.f32 %v855, 1.442695
        %v909 = vpow.pop %v908
        %v910 = vmul.f32 %v856, 1.442695
        %v911 = vpow.pop %v910
        %v912 = vmul.f32 %v857, 1.442695
        %v913 = vpow.pop %v912
        %v914 = vmul.f32 %v858, 1.442695
        %v915 = vpow.pop %v914
        %v916 = vmul.f32 %v859, 1.442695
        %v917 = vpow.pop %v916
        %v918 = vmul.f32 %v860, 1.442695
        %v919 = vpow.pop %v918
        %v920 = vmul.f32 %v861, 1.442695
        %v921 = vpow.pop %v920
        %v922 = vmul.f32 %v862, 1.442695
        %v923 = vpow.pop %v922
        %v924 = vmul.f32 %v863, 1.442695
        %v925 = vpow.pop %v924
        %v926 = vmul.f32 %v864, 1.442695
        %v927 = vpow.pop %v926
        %v928 = vmul.f32 %v865, 1.442695
        %v929 = vpow.pop %v928
        %v930 = vadd.f32 %v867, 1.0
        %v931 = vadd.f32 %v869, 1.0
        %v932 = vadd.f32 %v871, 1.0
        %v933 = vadd.f32 %v873, 1.0
        %v934 = vadd.f32 %v875, 1.0
        %v935 = vadd.f32 %v877, 1.0
        %v936 = vadd.f32 %v879, 1.0
        %v937 = vadd.f32 %v881, 1.0
        %v938 = vadd.f32 %v883, 1.0
        %v939 = vadd.f32 %v885, 1.0
        %v940 = vadd.f32 %v887, 1.0
        %v941 = vadd.f32 %v889, 1.0
        %v942 = vadd.f32 %v891, 1.0
        %v943 = vadd.f32 %v893, 1.0
        %v944 = vadd.f32 %v895, 1.0
        %v945 = vadd.f32 %v897, 1.0
        %v946 = vadd.f32 %v899, 1.0
        %v947 = vadd.f32 %v901, 1.0
        %v948 = vadd.f32 %v903, 1.0
        %v949 = vadd.f32 %v905, 1.0
        %v950 = vadd.f32 %v907, 1.0
        %v951 = vadd.f32 %v909, 1.0
        %v952 = vadd.f32 %v911, 1.0
        %v953 = vadd.f32 %v913, 1.0
        %v954 = vadd.f32 %v915, 1.0
        %v955 = vadd.f32 %v917, 1.0
        %v956 = vadd.f32 %v919, 1.0
        %v957 = vadd.f32 %v921, 1.0
        %v958 = vadd.f32 %v923, 1.0
        %v959 = vadd.f32 %v925, 1.0
        %v960 = vadd.f32 %v927, 1.0
        %v961 = vadd.f32 %v929, 1.0
        %v962 = vrcp.pop %v930
        %v963 = vmul.f32 1.0, %v962
        %v964 = vrcp.pop %v931
        %v965 = vmul.f32 1.0, %v964
        %v966 = vrcp.pop %v932
        %v967 = vmul.f32 1.0, %v966
        %v968 = vrcp.pop %v933
        %v969 = vmul.f32 1.0, %v968
        %v970 = vrcp.pop %v934
        %v971 = vmul.f32 1.0, %v970
        %v972 = vrcp.pop %v935
        %v973 = vmul.f32 1.0, %v972
        %v974 = vrcp.pop %v936
        %v975 = vmul.f32 1.0, %v974
        %v976 = vrcp.pop %v937
        %v977 = vmul.f32 1.0, %v976
        %v978 = vrcp.pop %v938
        %v979 = vmul.f32 1.0, %v978
        %v980 = vrcp.pop %v939
        %v981 = vmul.f32 1.0, %v980
        %v982 = vrcp.pop %v940
        %v983 = vmul.f32 1.0, %v982
        %v984 = vrcp.pop %v941
        %v985 = vmul.f32 1.0, %v984
        %v986 = vrcp.pop %v942
        %v987 = vmul.f32 1.0, %v986
        %v988 = vrcp.pop %v943
        %v989 = vmul.f32 1.0, %v988
        %v990 = vrcp.pop %v944
        %v991 = vmul.f32 1.0, %v990
        %v992 = vrcp.pop %v945
        %v993 = vmul.f32 1.0, %v992
        %v994 = vrcp.pop %v946
        %v995 = vmul.f32 1.0, %v994
        %v996 = vrcp.pop %v947
        %v997 = vmul.f32 1.0, %v996
        %v998 = vrcp.pop %v948
        %v999 = vmul.f32 1.0, %v998
        %v1000 = vrcp.pop %v949
        %v1001 = vmul.f32 1.0, %v1000
        %v1002 = vrcp.pop %v950
        %v1003 = vmul.f32 1.0, %v1002
        %v1004 = vrcp.pop %v951
        %v1005 = vmul.f32 1.0, %v1004
        %v1006 = vrcp.pop %v952
        %v1007 = vmul.f32 1.0, %v1006
        %v1008 = vrcp.pop %v953
        %v1009 = vmul.f32 1.0, %v1008
        %v1010 = vrcp.pop %v954
        %v1011 = vmul.f32 1.0, %v1010
        %v1012 = vrcp.pop %v955
        %v1013 = vmul.f32 1.0, %v1012
        %v1014 = vrcp.pop %v956
        %v1015 = vmul.f32 1.0, %v1014
        %v1016 = vrcp.pop %v957
        %v1017 = vmul.f32 1.0, %v1016
        %v1018 = vrcp.pop %v958
        %v1019 = vmul.f32 1.0, %v1018
        %v1020 = vrcp.pop %v959
        %v1021 = vmul.f32 1.0, %v1020
        %v1022 = vrcp.pop %v960
        %v1023 = vmul.f32 1.0, %v1022
        %v1024 = vrcp.pop %v961
        %v1025 = vmul.f32 1.0, %v1024
        %1026 = vst [vmem:[%s271] sm:$0xff] %v963
        %1027 = vst [vmem:[%s271 + $0x8] sm:$0xff] %v965
        %1028 = vst [vmem:[%s271 + $0x10] sm:$0xff] %v967
        %1029 = vst [vmem:[%s271 + $0x18] sm:$0xff] %v969
        %1030 = vst [vmem:[%s271 + $0x20] sm:$0xff] %v971
        %1031 = vst [vmem:[%s271 + $0x28] sm:$0xff] %v973
        %1032 = vst [vmem:[%s271 + $0x30] sm:$0xff] %v975
        %1033 = vst [vmem:[%s271 + $0x38] sm:$0xff] %v977
        %1034 = vst [vmem:[%s271 + $0x40] sm:$0xff] %v979
        %1035 = vst [vmem:[%s271 + $0x48] sm:$0xff] %v981
        %1036 = vst [vmem:[%s271 + $0x50] sm:$0xff] %v983
        %1037 = vst [vmem:[%s271 + $0x58] sm:$0xff] %v985
        %1038 = vst [vmem:[%s271 + $0x60] sm:$0xff] %v987
        %1039 = vst [vmem:[%s271 + $0x68] sm:$0xff] %v989
        %1040 = vst [vmem:[%s271 + $0x70] sm:$0xff] %v991
        %1041 = vst [vmem:[%s271 + $0x78] sm:$0xff] %v993
        %1042 = vst [vmem:[%s271 + $0x80] sm:$0xff] %v995
        %1043 = vst [vmem:[%s271 + $0x88] sm:$0xff] %v997
        %1044 = vst [vmem:[%s271 + $0x90] sm:$0xff] %v999
        %1045 = vst [vmem:[%s271 + $0x98] sm:$0xff] %v1001
        %1046 = vst [vmem:[%s271 + $0xa0] sm:$0xff] %v1003
        %1047 = vst [vmem:[%s271 + $0xa8] sm:$0xff] %v1005
        %1048 = vst [vmem:[%s271 + $0xb0] sm:$0xff] %v1007
        %1049 = vst [vmem:[%s271 + $0xb8] sm:$0xff] %v1009
        %1050 = vst [vmem:[%s271 + $0xc0] sm:$0xff] %v1011
        %1051 = vst [vmem:[%s271 + $0xc8] sm:$0xff] %v1013
        %1052 = vst [vmem:[%s271 + $0xd0] sm:$0xff] %v1015
        %1053 = vst [vmem:[%s271 + $0xd8] sm:$0xff] %v1017
        %1054 = vst [vmem:[%s271 + $0xe0] sm:$0xff] %v1019
        %1055 = vst [vmem:[%s271 + $0xe8] sm:$0xff] %v1021
        %1056 = vst [vmem:[%s271 + $0xf0] sm:$0xff] %v1023
        %1057 = vst [vmem:[%s271 + $0xf8] sm:$0xff] %v1025
        %s1058 = sand.u32 %s141, 1
        %s1059 = scalar_lea.sflag [#allocation4], %s1058
        %s1060 = sand.u32 %s141, 1
        %s1061 = smul.addr %s1060, 256
        %s1062 = scalar_lea.vmem [#allocation8], %s1061
        // Predicated region
        $region53: #{tpu_custom_call.1} parent=39 // pred_check
          %p1063 = pneg %p151
        $region54: #{tpu_custom_call.1} parent=39 // pred_check_branch
          %1065 = sbr.rel (%p1063) target = $region56
        $region55: #{tpu_custom_call.1} parent=39 // pred_region
          %s1066 = smul.u32 32, %s23
          %s1068 = ssub.s32 4096, 4096
          %1069 = vsyncadd %s1059, %s1068
          %s1070 = smul.addr %s1066, 128
          %s1071 = scalar_lea.hbm %s5, %s1070
          %s1072 = sshll.u32 %s1062, 4
          %s1073 = int_to_ptr.vmem [resolvable:$true] %s1072
          %1078 = dma.vmem_to_hbm [thread:$0]  %s1073, 4096, %s1071, %s1059, 128, 128, 8
        $region56: #{tpu_custom_call.1} parent=39 // pred_fallthru
          _
      $region40: #{tpu_custom_call.1} parent=5 // pred_fallthru
        _
      %p1079 = scmp.le.s32.totalorder 2, %s18
      // Predicated region
      $region57: #{tpu_custom_call.1} parent=5 // pred_check
        %p1080 = pneg %p1079
      $region58: #{tpu_custom_call.1} parent=5 // pred_check_branch
        %1082 = sbr.rel (%p1080) target = $region60
      $region59: #{tpu_custom_call.1} parent=5 // pred_region
        %s1083 = ssub.s32 %s18, 2
        // Predicated region
        $region61: #{tpu_custom_call.1} parent=59 // pred_check
          %p1084 = pneg %p157
        $region62: #{tpu_custom_call.1} parent=59 // pred_check_branch
          %1086 = sbr.rel (%p1084) target = $region64
        $region63: #{tpu_custom_call.1} parent=59 // pred_region
          %s1087 = sand.u32 %s142, 1
          %s1088 = scalar_lea.sflag [#allocation4], %s1087
          %s1089 = sand.u32 %s142, 1
          %s1090 = smul.addr %s1089, 256
          %s1091 = scalar_lea.vmem [#allocation8], %s1090
          %1092 = dma.done %s1088, 4096
        $region64: #{tpu_custom_call.1} parent=59 // pred_fallthru
          _
      $region60: #{tpu_custom_call.1} parent=5 // pred_fallthru
        _
    $region6: #{tpu_custom_call.1} parent=1 // loop_footer
      %s22 = sadd.s32 1, %s18
    $region7: #{tpu_custom_call.1} parent=1 // loop_footer_branch
      %17 = sbr.rel target = $region3
    $region8: #{tpu_custom_call.1} parent=1 // loop_exit
      _
    %1093 = vsyncpa [#allocation3], 1
    %s1094 = scalar_lea.sflag [#allocation3], 1
    %1095 = vsyncpa %s1094, 1
    %1096 = vsyncpa [#allocation6], 1
    %1097 = vsyncpa [#allocation4], 1
    %s1098 = scalar_lea.sflag [#allocation4], 1
    %1099 = vsyncpa %s1098, 1

</llo_original>
